<compile_context>
chip_gen: v7x
topology: tpu7x:2x2x1
jax: 0.10.0
libtpu: 0.0.40
codegen_flags: <defaults>
</compile_context>

<pallas_src>
import jax
import jax.numpy as jnp
from jax.experimental import pallas as pl
from jax.experimental.pallas import tpu as pltpu

LANE = 128          # lane-padded channel width (in 7, hidden 32, classes 30 -> 128)
NEG = -1e30         # bias mask for padded class logits
MiB = 1024 * 1024


def _round_up(n, m):
    return ((n + m - 1) // m) * m


def _pad_to(x, shape):
    pads = [(0, t - s) for s, t in zip(x.shape, shape)]
    return jnp.pad(x, pads)


def _vmem_budget():
    """Generation-aware VMEM budget (v7x: 64 MiB physical, v5e/v6e: 128 MiB)."""
    cap = 64 * MiB
    try:
        cap = int(getattr(pltpu.get_tpu_info(), "vmem_capacity_bytes", cap))
    except Exception:
        pass
    # leave headroom for double-buffering + compiler-internal scratch
    return min(int(cap * 3 // 4), 100 * MiB)


VMEM_BUDGET = _vmem_budget()


def _pick_tiles(n):
    """Big tiles (512 preferred) for the A@X stream; keep >=2 row tiles (v7x has 2 TCs)."""
    tk = next((t for t in (512, 256, 128) if n % t == 0), None)
    assert tk is not None, "padded node count must be a multiple of 128"
    tm = tk
    while n // tm < 2 and tm > 128 and n % (tm // 2) == 0:
        tm //= 2
    return tm, tk


# ---------------------------------------------------------------------------
# Shared head math: global-mean-pooled features -> lin1+relu -> lin2 -> lin3
# -> log_softmax (padded classes carry a -1e30 bias -> exp()==0, never the max)
# ---------------------------------------------------------------------------
def _head(pooled_f32, w1, b1, w2, b2, w3, b3):
    pooled = pooled_f32.astype(jnp.bfloat16)
    h1 = jnp.maximum(
        jnp.dot(pooled, w1, preferred_element_type=jnp.float32) + b1, 0.0)
    # F.dropout(p=0.5, training=False) -> identity
    feat = jnp.dot(h1.astype(jnp.bfloat16), w2,
                   preferred_element_type=jnp.float32) + b2
    logits = jnp.dot(feat.astype(jnp.bfloat16), w3,
                     preferred_element_type=jnp.float32) + b3
    m = jnp.max(logits, axis=-1, keepdims=True)
    z = logits - m
    lse = jnp.log(jnp.sum(jnp.exp(z), axis=-1, keepdims=True))
    return z - lse, feat


# ---------------------------------------------------------------------------
# Kernel A: fully fused forward (small graphs).  A_hat / X / weights resident.
# ---------------------------------------------------------------------------
def _make_fused_kernel(num_layers):
    def kernel(a_ref, x_ref, pool_ref, cw_ref, cb_ref,
               w1_ref, b1_ref, w2_ref, b2_ref, w3_ref, b3_ref,
               logp_ref, feat_ref):
        h = x_ref[...]
        for l in range(num_layers):                       # static, unrolled
            ah = jnp.dot(a_ref[...], h, preferred_element_type=jnp.float32)
            hw = jnp.dot(ah.astype(jnp.bfloat16), cw_ref[l],
                         preferred_element_type=jnp.float32) + cb_ref[l]
            h = jnp.maximum(hw, 0.0).astype(jnp.bfloat16)
        pooled = jnp.dot(pool_ref[...], h, preferred_element_type=jnp.float32)
        logp, feat = _head(pooled, w1_ref[...], b1_ref[...], w2_ref[...],
                           b2_ref[...], w3_ref[...], b3_ref[...])
        logp_ref[...] = logp
        feat_ref[...] = feat
    return kernel


def fused_forward(a_hat, x, pool_mat, cw, cb, head, vmem_limit):
    w1, b1, w2, b2, w3, b3 = head
    n, c = x.shape
    num_layers = int(cw.shape[0])
    bsz = pool_mat.shape[0]
    feat_dim = w2.shape[1]
    cls_pad = w3.shape[1]
    return pl.pallas_call(
        _make_fused_kernel(num_layers),
        out_shape=(jax.ShapeDtypeStruct((bsz, cls_pad), jnp.float32),
                   jax.ShapeDtypeStruct((bsz, feat_dim), jnp.float32)),
        grid_spec=pltpu.PrefetchScalarGridSpec(
            num_scalar_prefetch=0,
            grid=(1,),
            in_specs=[
                pl.BlockSpec((n, n), lambda i: (0, 0)),                 # A_hat
                pl.BlockSpec((n, c), lambda i: (0, 0)),                 # X
                pl.BlockSpec((bsz, n), lambda i: (0, 0)),               # pool_mat
                pl.BlockSpec((num_layers, c, c), lambda i: (0, 0, 0)),  # conv Ws
                pl.BlockSpec((num_layers, 1, c), lambda i: (0, 0, 0)),  # conv bs
                pl.BlockSpec((c, c), lambda i: (0, 0)),                 # W1
                pl.BlockSpec((1, c), lambda i: (0, 0)),                 # b1
                pl.BlockSpec((c, feat_dim), lambda i: (0, 0)),          # W2
                pl.BlockSpec((1, feat_dim), lambda i: (0, 0)),          # b2
                pl.BlockSpec((feat_dim, cls_pad), lambda i: (0, 0)),    # W3
                pl.BlockSpec((1, cls_pad), lambda i: (0, 0)),           # b3 (masked)
            ],
            out_specs=(pl.BlockSpec((bsz, cls_pad), lambda i: (0, 0)),
                       pl.BlockSpec((bsz, feat_dim), lambda i: (0, 0))),
        ),
        compiler_params=pltpu.CompilerParams(
            dimension_semantics=("arbitrary",),
            vmem_limit_bytes=vmem_limit,
        ),
        cost_estimate=pl.CostEstimate(
            flops=int(2 * num_layers * (n * n * c + n * c * c)
                      + 2 * bsz * (n * c + c * c + c * feat_dim + feat_dim * cls_pad)),
            transcendentals=int(bsz * cls_pad),
            bytes_accessed=int(n * n * 2 + n * c * 2 + bsz * n * 2
                               + num_layers * (c * c * 2 + c * 4)
                               + (c * c + c * feat_dim + feat_dim * cls_pad) * 2
                               + bsz * (cls_pad + feat_dim) * 4),
        ),
    )(a_hat, x, pool_mat, cw, cb, w1, b1, w2, b2, w3, b3)


# ---------------------------------------------------------------------------
# Kernel B: one (non-last) GCNConv layer + ReLU, tiled over (row, k) tiles.
#   acc[i] += A[i,k] @ X[k]      (f32 accumulator, bf16 inputs, X resident)
#   out[i]  = relu(acc[i] @ W + b)   (epilogue, once per row tile)
# ---------------------------------------------------------------------------
def _make_layer_kernel(tk, x_resident):
    def kernel(a_ref, x_ref, w_ref, b_ref, o_ref, acc_ref):
        k = pl.program_id(1)

        @pl.when(k == 0)
        def _():
            acc_ref[...] = jnp.zeros_like(acc_ref)

        if x_resident:
            off = pl.multiple_of(k * tk, tk)
            x_tile = x_ref[pl.ds(off, tk), :]
        else:
            x_tile = x_ref[...]
        acc_ref[...] += jnp.dot(a_ref[...], x_tile,
                                preferred_element_type=jnp.float32)

        @pl.when(k == pl.num_programs(1) - 1)
        def _():
            h = jnp.dot(acc_ref[...].astype(jnp.bfloat16), w_ref[...],
                        preferred_element_type=jnp.float32) + b_ref[...]
            o_ref[...] = jnp.maximum(h, 0.0).astype(o_ref.dtype)
    return kernel


def gcn_layer(a_hat, x, w, b, vmem_limit):
    n = a_hat.shape[0]
    c = x.shape[1]
    tm, tk = _pick_tiles(n)
    grid = (n // tm, n // tk)
    # keep X resident in VMEM (read once) when it comfortably fits the budget
    x_resident = (2 * n * c * 2 + 4 * tm * tk * 2 + 4 * tm * c * 2
                  + tm * c * 4 + 2 * MiB) <= vmem_limit
    if x_resident:
        x_spec = pl.BlockSpec((n, c), lambda i, k: (0, 0))
        x_bytes = n * c * 2
    else:
        x_spec = pl.BlockSpec((tk, c), lambda i, k: (k, 0))
        x_bytes = (n // tm) * n * c * 2            # X re-streamed per row tile
    return pl.pallas_call(
        _make_layer_kernel(tk, x_resident),
        out_shape=jax.ShapeDtypeStruct((n, c), jnp.bfloat16),
        grid_spec=pltpu.PrefetchScalarGridSpec(
            num_scalar_prefetch=0,
            grid=grid,
            in_specs=[
                pl.BlockSpec((tm, tk), lambda i, k: (i, k)),   # A_hat tile
                x_spec,                                         # X (resident / tile)
                pl.BlockSpec((c, c), lambda i, k: (0, 0)),      # W (resident)
                pl.BlockSpec((1, c), lambda i, k: (0, 0)),      # bias
            ],
            out_specs=pl.BlockSpec((tm, c), lambda i, k: (i, 0)),
            scratch_shapes=[pltpu.VMEM((tm, c), jnp.float32)],
        ),
        compiler_params=pltpu.CompilerParams(
            dimension_semantics=("parallel", "arbitrary"),
            vmem_limit_bytes=vmem_limit,
        ),
        cost_estimate=pl.CostEstimate(
            flops=int(2 * n * n * c + 2 * n * c * c),
            transcendentals=0,
            bytes_accessed=int(n * n * 2 + x_bytes + n * c * 2 + c * c * 2 + c * 4),
        ),
    )(a_hat, x, w, b)


# ---------------------------------------------------------------------------
# Kernel C: LAST GCNConv layer with global_mean_pool + MLP head fused in.
# h of the last layer never goes to HBM; pooled (B,c) accumulates in VMEM and
# the tiny head runs once at the final grid step.
# ---------------------------------------------------------------------------
def _make_last_kernel(tk, x_resident):
    def kernel(a_ref, x_ref, pool_ref, w_ref, b_ref,
               w1_ref, b1_ref, w2_ref, b2_ref, w3_ref, b3_ref,
               logp_ref, feat_ref, acc_ref, pooled_ref):
        i = pl.program_id(0)
        k = pl.program_id(1)

        @pl.when(jnp.logical_and(i == 0, k == 0))
        def _():
            pooled_ref[...] = jnp.zeros_like(pooled_ref)

        @pl.when(k == 0)
        def _():
            acc_ref[...] = jnp.zeros_like(acc_ref)

        if x_resident:
            off = pl.multiple_of(k * tk, tk)
            x_tile = x_ref[pl.ds(off, tk), :]
        else:
            x_tile = x_ref[...]
        acc_ref[...] += jnp.dot(a_ref[...], x_tile,
                                preferred_element_type=jnp.float32)

        @pl.when(k == pl.num_programs(1) - 1)
        def _():
            h = jnp.dot(acc_ref[...].astype(jnp.bfloat16), w_ref[...],
                        preferred_element_type=jnp.float32) + b_ref[...]
            h = jnp.maximum(h, 0.0).astype(jnp.bfloat16)
            # global_mean_pool fused in: pool_ref holds this row tile's columns
            pooled_ref[...] += jnp.dot(pool_ref[...], h,
                                       preferred_element_type=jnp.float32)

            @pl.when(i == pl.num_programs(0) - 1)
            def _():
                logp, feat = _head(pooled_ref[...], w1_ref[...], b1_ref[...],
                                   w2_ref[...], b2_ref[...], w3_ref[...],
                                   b3_ref[...])
                logp_ref[...] = logp
                feat_ref[...] = feat
    return kernel


def gcn_last_layer(a_hat, x, pool_mat, w, b, head, vmem_limit):
    w1, b1, w2, b2, w3, b3 = head
    n = a_hat.shape[0]
    c = x.shape[1]
    bsz = pool_mat.shape[0]
    feat_dim = w2.shape[1]
    cls_pad = w3.shape[1]
    tm, tk = _pick_tiles(n)
    grid = (n // tm, n // tk)
    x_resident = (2 * n * c * 2 + 4 * tm * tk * 2 + tm * c * 4 + 2 * MiB) <= vmem_limit
    if x_resident:
        x_spec = pl.BlockSpec((n, c), lambda i, k: (0, 0))
        x_bytes = n * c * 2
    else:
        x_spec = pl.BlockSpec((tk, c), lambda i, k: (k, 0))
        x_bytes = (n // tm) * n * c * 2
    return pl.pallas_call(
        _make_last_kernel(tk, x_resident),
        out_shape=(jax.ShapeDtypeStruct((bsz, cls_pad), jnp.float32),
                   jax.ShapeDtypeStruct((bsz, feat_dim), jnp.float32)),
        grid_spec=pltpu.PrefetchScalarGridSpec(
            num_scalar_prefetch=0,
            grid=grid,
            in_specs=[
                pl.BlockSpec((tm, tk), lambda i, k: (i, k)),            # A_hat tile
                x_spec,                                                  # X
                pl.BlockSpec((bsz, tm), lambda i, k: (0, i)),            # pool cols
                pl.BlockSpec((c, c), lambda i, k: (0, 0)),               # W_conv
                pl.BlockSpec((1, c), lambda i, k: (0, 0)),               # b_conv
                pl.BlockSpec((c, c), lambda i, k: (0, 0)),               # W1
                pl.BlockSpec((1, c), lambda i, k: (0, 0)),               # b1
                pl.BlockSpec((c, feat_dim), lambda i, k: (0, 0)),        # W2
                pl.BlockSpec((1, feat_dim), lambda i, k: (0, 0)),        # b2
                pl.BlockSpec((feat_dim, cls_pad), lambda i, k: (0, 0)),  # W3
                pl.BlockSpec((1, cls_pad), lambda i, k: (0, 0)),         # b3 (masked)
            ],
            out_specs=(pl.BlockSpec((bsz, cls_pad), lambda i, k: (0, 0)),
                       pl.BlockSpec((bsz, feat_dim), lambda i, k: (0, 0))),
            scratch_shapes=[pltpu.VMEM((tm, c), jnp.float32),
                            pltpu.VMEM((bsz, c), jnp.float32)],
        ),
        compiler_params=pltpu.CompilerParams(
            # pooled accumulator reduces across BOTH grid axes -> serial grid
            dimension_semantics=("arbitrary", "arbitrary"),
            vmem_limit_bytes=vmem_limit,
        ),
        cost_estimate=pl.CostEstimate(
            flops=int(2 * n * n * c + 2 * n * c * c + 2 * bsz * n * c
                      + 2 * bsz * (c * c + c * feat_dim + feat_dim * cls_pad)),
            transcendentals=int(bsz * cls_pad),
            bytes_accessed=int(n * n * 2 + x_bytes + bsz * n * 2
                               + c * c * 2 + c * 4
                               + (c * c + c * feat_dim + feat_dim * cls_pad) * 2
                               + bsz * (cls_pad + feat_dim) * 4),
        ),
    )(a_hat, x, pool_mat, w, b, w1, b1, w2, b2, w3, b3)


# ---------------------------------------------------------------------------
# Forward dispatch + plain-JAX glue (normalized adjacency, pool operator).
# ---------------------------------------------------------------------------
def _fused_fits(n, c, budget):
    # A (value + double-buffered ref) + f32 temps for A@h / h, plus slack
    need = 4 * n * n * 2 + 8 * n * c * 4 + 4 * MiB
    return need <= budget


def gcn_forward(x_pad, a_hat, pool_mat, params, num_classes, force_tiled=False):
    cw, cb, head = params
    n, c = x_pad.shape
    num_layers = cw.shape[0]
    if (not force_tiled) and _fused_fits(n, c, VMEM_BUDGET):
        # whole forward in ONE kernel: A / X / weights resident in VMEM
        logp_pad, feat = fused_forward(a_hat, x_pad, pool_mat, cw, cb, head,
                                       VMEM_BUDGET)
    else:
        h = x_pad
        for l in range(num_layers - 1):
            h = gcn_layer(a_hat, h, cw[l], cb[l], VMEM_BUDGET)
        # last GCNConv layer with global_mean_pool + MLP head fused in
        logp_pad, feat = gcn_last_layer(a_hat, h, pool_mat,
                                        cw[num_layers - 1], cb[num_layers - 1],
                                        head, VMEM_BUDGET)
    return logp_pad[:, :num_classes], feat


def build_norm_adj(edge_index, num_nodes):
    # NOTE: duplicate edges collapse to weight 1 (matches de-duplicated PyG input).
    adj = jnp.zeros((num_nodes, num_nodes), jnp.float32)
    adj = adj.at[edge_index[0], edge_index[1]].set(1.0)
    adj = adj + jnp.eye(num_nodes, dtype=jnp.float32)       # self loops
    deg = jnp.sum(adj, axis=1)
    d_inv_sqrt = jnp.where(deg > 0, 1.0 / jnp.sqrt(deg), 0.0)
    return d_inv_sqrt[:, None] * adj * d_inv_sqrt[None, :]  # D^-1/2 (A+I) D^-1/2


def build_pool_mat(batch, num_graphs):
    onehot = (batch[None, :] == jnp.arange(num_graphs)[:, None]).astype(jnp.float32)
    counts = jnp.maximum(jnp.sum(onehot, axis=1, keepdims=True), 1.0)
    return onehot / counts


# ---------------------------------------------------------------------------
# Pure-JAX reference mirroring the kernels' bf16/f32 mixed precision.
# ---------------------------------------------------------------------------
def ref_forward(x_pad, a_hat, pool_mat, params, num_classes):
    cw, cb, (w1, b1, w2, b2, w3, b3) = params
    h = x_pad
    for l in range(cw.shape[0]):
        ax = jnp.dot(a_hat, h, preferred_element_type=jnp.float32)
        hw = jnp.dot(ax.astype(jnp.bfloat16), cw[l],
                     preferred_element_type=jnp.float32) + cb[l]
        h = jnp.maximum(hw, 0.0).astype(jnp.bfloat16)
    pooled = jnp.dot(pool_mat, h,
                     preferred_element_type=jnp.float32).astype(jnp.bfloat16)
    h1 = jnp.maximum(
        jnp.dot(pooled, w1, preferred_element_type=jnp.float32) + b1, 0.0)
    feat = jnp.dot(h1.astype(jnp.bfloat16), w2,
                   preferred_element_type=jnp.float32) + b2
    logits = jnp.dot(feat.astype(jnp.bfloat16), w3,
                     preferred_element_type=jnp.float32) + b3
    logp = jax.nn.log_softmax(logits, axis=-1)
    return logp[:, :num_classes], feat


def glorot(key, shape):
    lim = jnp.sqrt(6.0 / (shape[0] + shape[1]))
    return jax.random.uniform(key, shape, jnp.float32, -lim, lim)


if __name__ == "__main__":
    # ------------- model config (from GCN.__init__) -------------
    num_layers = 3          # conv1 + 2 extra GCNConv layers
    hidden = 32
    in_feats = 7
    num_classes = 30
    feat_dim = 256
    B = 2                   # graphs per batch

    key = jax.random.PRNGKey(0)
    keys = jax.random.split(key, 24)
    kidx = 0

    # ------------- parameters (lane-padded, bf16 weights / f32 biases) ------
    conv_ws, conv_bs = [], []
    w = glorot(keys[kidx], (in_feats, hidden)); kidx += 1
    b = 0.01 * jax.random.normal(keys[kidx], (1, hidden), jnp.float32); kidx += 1
    conv_ws.append(_pad_to(w, (LANE, LANE))); conv_bs.append(_pad_to(b, (1, LANE)))
    for _ in range(num_layers - 1):
        w = glorot(keys[kidx], (hidden, hidden)); kidx += 1
        b = 0.01 * jax.random.normal(keys[kidx], (1, hidden), jnp.float32); kidx += 1
        conv_ws.append(_pad_to(w, (LANE, LANE))); conv_bs.append(_pad_to(b, (1, LANE)))
    cw = jnp.stack(conv_ws).astype(jnp.bfloat16)     # (L, 128, 128) bf16
    cb = jnp.stack(conv_bs)                          # (L, 1, 128)  f32

    w1 = glorot(keys[kidx], (hidden, hidden)); kidx += 1
    b1 = 0.01 * jax.random.normal(keys[kidx], (1, hidden), jnp.float32); kidx += 1
    w2 = glorot(keys[kidx], (hidden, feat_dim)); kidx += 1
    b2 = 0.01 * jax.random.normal(keys[kidx], (1, feat_dim), jnp.float32); kidx += 1
    w3 = glorot(keys[kidx], (feat_dim, num_classes)); kidx += 1
    b3 = 0.01 * jax.random.normal(keys[kidx], (1, num_classes), jnp.float32); kidx += 1

    cls_pad = LANE
    b3_pad = jnp.full((1, cls_pad), NEG, jnp.float32).at[:, :num_classes].set(b3)
    head = (
        _pad_to(w1, (LANE, LANE)).astype(jnp.bfloat16), _pad_to(b1, (1, LANE)),
        _pad_to(w2, (LANE, feat_dim)).astype(jnp.bfloat16), b2,
        _pad_to(w3, (feat_dim, cls_pad)).astype(jnp.bfloat16), b3_pad,
    )
    params = (cw, cb, head)

    # ------------- synthetic two-ring graph batches -------------
    def make_graph(N, pad_to, kx):
        x = jax.random.normal(kx, (N, in_feats), jnp.float32)
        half = N // 2

        def ring_edges(start, count):
            idx = jnp.arange(count, dtype=jnp.int32) + start
            nxt = jnp.where(idx + 1 < start + count, idx + 1, start)
            return jnp.stack([jnp.concatenate([idx, nxt]),
                              jnp.concatenate([nxt, idx])])

        edge_index = jnp.concatenate(
            [ring_edges(0, half), ring_edges(half, N - half)], axis=1)
        batch = jnp.concatenate([jnp.zeros(half, jnp.int32),
                                 jnp.ones(N - half, jnp.int32)])
        a_pad = _pad_to(build_norm_adj(edge_index, N),
                        (pad_to, pad_to)).astype(jnp.bfloat16)
        x_pad = _pad_to(x, (pad_to, LANE)).astype(jnp.bfloat16)
        pool = _pad_to(build_pool_mat(batch, B), (B, pad_to)).astype(jnp.bfloat16)
        return x_pad, a_pad, pool

    fwd = jax.jit(gcn_forward, static_argnums=(4, 5))

    def check(x_pad, a_pad, pool, force_tiled):
        logp, feat = fwd(x_pad, a_pad, pool, params, num_classes, force_tiled)
        jax.block_until_ready((logp, feat))
        assert logp.shape == (B, num_classes)
        assert feat.shape == (B, feat_dim)
        # log_softmax rows sum to ~1 in prob space
        assert jnp.allclose(jnp.sum(jnp.exp(logp), axis=-1), 1.0, atol=1e-3)
        logp_ref, feat_ref = ref_forward(x_pad, a_pad, pool, params, num_classes)
        assert jnp.allclose(feat, feat_ref, rtol=2e-2, atol=2e-2)
        assert jnp.allclose(logp, logp_ref, rtol=2e-2, atol=2e-2)

    # 1) small graph (200 nodes -> padded 256): fully fused single-kernel path
    check(*make_graph(200, 256, keys[kidx]), force_tiled=False); kidx += 1
    # 2) larger graph (1000 nodes -> padded 1024): tiled multi-kernel path
    #    (big tiles, X resident, pool+head fused into last layer)
    check(*make_graph(1000, 1024, keys[kidx]), force_tiled=True); kidx += 1

    print("KERNEL_OK")
</pallas_src>

<mosaic_0001>
module attributes {stable_mosaic.version = 11 : i64} {
  func.func @kernel(%arg0: i32, %arg1: memref<256x256xbf16, #tpu.memory_space<vmem>>, %arg2: memref<256x128xbf16, #tpu.memory_space<vmem>>, %arg3: memref<2x256xbf16, #tpu.memory_space<vmem>>, %arg4: memref<3x128x128xbf16, #tpu.memory_space<vmem>>, %arg5: memref<3x1x128xf32, #tpu.memory_space<vmem>>, %arg6: memref<128x128xbf16, #tpu.memory_space<vmem>>, %arg7: memref<1x128xf32, #tpu.memory_space<vmem>>, %arg8: memref<128x256xbf16, #tpu.memory_space<vmem>>, %arg9: memref<1x256xf32, #tpu.memory_space<vmem>>, %arg10: memref<256x128xbf16, #tpu.memory_space<vmem>>, %arg11: memref<1x128xf32, #tpu.memory_space<vmem>>, %arg12: memref<2x128xf32, #tpu.memory_space<vmem>>, %arg13: memref<2x256xf32, #tpu.memory_space<vmem>>) attributes {dimension_semantics = [#tpu.dimension_semantics<arbitrary>], iteration_bounds = array<i64: 1>, scalar_prefetch = 0 : i64, scratch_operands = 0 : i64, tpu.core_type = #tpu.core_type<tc>, window_params = [{pipeline_mode = #tpu.pipeline_mode<synchronous>, transform_indices = @transform_0, window_bounds = array<i64: 256, 256>}, {pipeline_mode = #tpu.pipeline_mode<synchronous>, transform_indices = @transform_1, window_bounds = array<i64: 256, 128>}, {pipeline_mode = #tpu.pipeline_mode<synchronous>, transform_indices = @transform_2, window_bounds = array<i64: 2, 256>}, {pipeline_mode = #tpu.pipeline_mode<synchronous>, transform_indices = @transform_3, window_bounds = array<i64: 3, 128, 128>}, {pipeline_mode = #tpu.pipeline_mode<synchronous>, transform_indices = @transform_4, window_bounds = array<i64: 3, 1, 128>}, {pipeline_mode = #tpu.pipeline_mode<synchronous>, transform_indices = @transform_5, window_bounds = array<i64: 128, 128>}, {pipeline_mode = #tpu.pipeline_mode<synchronous>, transform_indices = @transform_6, window_bounds = array<i64: 1, 128>}, {pipeline_mode = #tpu.pipeline_mode<synchronous>, transform_indices = @transform_7, window_bounds = array<i64: 128, 256>}, {pipeline_mode = #tpu.pipeline_mode<synchronous>, transform_indices = @transform_8, window_bounds = array<i64: 1, 256>}, {pipeline_mode = #tpu.pipeline_mode<synchronous>, transform_indices = @transform_9, window_bounds = array<i64: 256, 128>}, {pipeline_mode = #tpu.pipeline_mode<synchronous>, transform_indices = @transform_10, window_bounds = array<i64: 1, 128>}, {pipeline_mode = #tpu.pipeline_mode<synchronous>, transform_indices = @transform_11, window_bounds = array<i64: 2, 128>}, {pipeline_mode = #tpu.pipeline_mode<synchronous>, transform_indices = @transform_12, window_bounds = array<i64: 2, 256>}]} {
    %c0 = arith.constant 0 : index
    %c0_0 = arith.constant 0 : index
    %0 = vector.load %arg2[%c0, %c0_0] : memref<256x128xbf16, #tpu.memory_space<vmem>>, vector<256x128xbf16>
    %c0_1 = arith.constant 0 : index
    %c0_2 = arith.constant 0 : index
    %1 = vector.load %arg1[%c0_1, %c0_2] : memref<256x256xbf16, #tpu.memory_space<vmem>>, vector<256x256xbf16>
    %cst = arith.constant dense<0.000000e+00> : vector<256x128xf32>
    %2 = tpu.matmul %1, %0, %cst {dimension_numbers = #tpu.dot_dimension_numbers<[1], [0], [0], [1], [0, 0, 1, 1], [], []>} : vector<256x256xbf16>, vector<256x128xbf16>, vector<256x128xf32> -> vector<256x128xf32>
    %3 = arith.truncf %2 : vector<256x128xf32> to vector<256x128xbf16>
    %c0_3 = arith.constant 0 : index
    %c0_4 = arith.constant 0 : index
    %c0_5 = arith.constant 0 : index
    %4 = vector.load %arg4[%c0_3, %c0_4, %c0_5] : memref<3x128x128xbf16, #tpu.memory_space<vmem>>, vector<1x128x128xbf16>
    %5 = vector.shape_cast %4 : vector<1x128x128xbf16> to vector<128x128xbf16>
    %cst_6 = arith.constant dense<0.000000e+00> : vector<256x128xf32>
    %6 = tpu.matmul %3, %5, %cst_6 {dimension_numbers = #tpu.dot_dimension_numbers<[1], [0], [0], [1], [0, 0, 1, 1], [], []>} : vector<256x128xbf16>, vector<128x128xbf16>, vector<256x128xf32> -> vector<256x128xf32>
    %c0_7 = arith.constant 0 : index
    %c0_8 = arith.constant 0 : index
    %c0_9 = arith.constant 0 : index
    %7 = vector.load %arg5[%c0_7, %c0_8, %c0_9] : memref<3x1x128xf32, #tpu.memory_space<vmem>>, vector<1x1x128xf32>
    %8 = vector.shape_cast %7 : vector<1x1x128xf32> to vector<1x128xf32>
    %9 = vector.broadcast %8 : vector<1x128xf32> to vector<256x128xf32>
    %10 = arith.addf %6, %9 : vector<256x128xf32>
    %cst_10 = arith.constant 0.000000e+00 : f32
    %11 = vector.broadcast %cst_10 : f32 to vector<256x128xf32>
    %12 = arith.maximumf %10, %11 : vector<256x128xf32>
    %13 = arith.truncf %12 : vector<256x128xf32> to vector<256x128xbf16>
    %c0_11 = arith.constant 0 : index
    %c0_12 = arith.constant 0 : index
    %14 = vector.load %arg1[%c0_11, %c0_12] : memref<256x256xbf16, #tpu.memory_space<vmem>>, vector<256x256xbf16>
    %cst_13 = arith.constant dense<0.000000e+00> : vector<256x128xf32>
    %15 = tpu.matmul %14, %13, %cst_13 {dimension_numbers = #tpu.dot_dimension_numbers<[1], [0], [0], [1], [0, 0, 1, 1], [], []>} : vector<256x256xbf16>, vector<256x128xbf16>, vector<256x128xf32> -> vector<256x128xf32>
    %16 = arith.truncf %15 : vector<256x128xf32> to vector<256x128xbf16>
    %c1 = arith.constant 1 : index
    %c0_14 = arith.constant 0 : index
    %c0_15 = arith.constant 0 : index
    %17 = vector.load %arg4[%c1, %c0_14, %c0_15] : memref<3x128x128xbf16, #tpu.memory_space<vmem>>, vector<1x128x128xbf16>
    %18 = vector.shape_cast %17 : vector<1x128x128xbf16> to vector<128x128xbf16>
    %cst_16 = arith.constant dense<0.000000e+00> : vector<256x128xf32>
    %19 = tpu.matmul %16, %18, %cst_16 {dimension_numbers = #tpu.dot_dimension_numbers<[1], [0], [0], [1], [0, 0, 1, 1], [], []>} : vector<256x128xbf16>, vector<128x128xbf16>, vector<256x128xf32> -> vector<256x128xf32>
    %c1_17 = arith.constant 1 : index
    %c0_18 = arith.constant 0 : index
    %c0_19 = arith.constant 0 : index
    %20 = vector.load %arg5[%c1_17, %c0_18, %c0_19] : memref<3x1x128xf32, #tpu.memory_space<vmem>>, vector<1x1x128xf32>
    %21 = vector.shape_cast %20 : vector<1x1x128xf32> to vector<1x128xf32>
    %22 = vector.broadcast %21 : vector<1x128xf32> to vector<256x128xf32>
    %23 = arith.addf %19, %22 : vector<256x128xf32>
    %cst_20 = arith.constant 0.000000e+00 : f32
    %24 = vector.broadcast %cst_20 : f32 to vector<256x128xf32>
    %25 = arith.maximumf %23, %24 : vector<256x128xf32>
    %26 = arith.truncf %25 : vector<256x128xf32> to vector<256x128xbf16>
    %c0_21 = arith.constant 0 : index
    %c0_22 = arith.constant 0 : index
    %27 = vector.load %arg1[%c0_21, %c0_22] : memref<256x256xbf16, #tpu.memory_space<vmem>>, vector<256x256xbf16>
    %cst_23 = arith.constant dense<0.000000e+00> : vector<256x128xf32>
    %28 = tpu.matmul %27, %26, %cst_23 {dimension_numbers = #tpu.dot_dimension_numbers<[1], [0], [0], [1], [0, 0, 1, 1], [], []>} : vector<256x256xbf16>, vector<256x128xbf16>, vector<256x128xf32> -> vector<256x128xf32>
    %29 = arith.truncf %28 : vector<256x128xf32> to vector<256x128xbf16>
    %c2 = arith.constant 2 : index
    %c0_24 = arith.constant 0 : index
    %c0_25 = arith.constant 0 : index
    %30 = vector.load %arg4[%c2, %c0_24, %c0_25] : memref<3x128x128xbf16, #tpu.memory_space<vmem>>, vector<1x128x128xbf16>
    %31 = vector.shape_cast %30 : vector<1x128x128xbf16> to vector<128x128xbf16>
    %cst_26 = arith.constant dense<0.000000e+00> : vector<256x128xf32>
    %32 = tpu.matmul %29, %31, %cst_26 {dimension_numbers = #tpu.dot_dimension_numbers<[1], [0], [0], [1], [0, 0, 1, 1], [], []>} : vector<256x128xbf16>, vector<128x128xbf16>, vector<256x128xf32> -> vector<256x128xf32>
    %c2_27 = arith.constant 2 : index
    %c0_28 = arith.constant 0 : index
    %c0_29 = arith.constant 0 : index
    %33 = vector.load %arg5[%c2_27, %c0_28, %c0_29] : memref<3x1x128xf32, #tpu.memory_space<vmem>>, vector<1x1x128xf32>
    %34 = vector.shape_cast %33 : vector<1x1x128xf32> to vector<1x128xf32>
    %35 = vector.broadcast %34 : vector<1x128xf32> to vector<256x128xf32>
    %36 = arith.addf %32, %35 : vector<256x128xf32>
    %cst_30 = arith.constant 0.000000e+00 : f32
    %37 = vector.broadcast %cst_30 : f32 to vector<256x128xf32>
    %38 = arith.maximumf %36, %37 : vector<256x128xf32>
    %39 = arith.truncf %38 : vector<256x128xf32> to vector<256x128xbf16>
    %c0_31 = arith.constant 0 : index
    %c0_32 = arith.constant 0 : index
    %40 = vector.load %arg3[%c0_31, %c0_32] : memref<2x256xbf16, #tpu.memory_space<vmem>>, vector<2x256xbf16>
    %cst_33 = arith.constant dense<0.000000e+00> : vector<2x128xf32>
    %41 = tpu.matmul %40, %39, %cst_33 {dimension_numbers = #tpu.dot_dimension_numbers<[1], [0], [0], [1], [0, 0, 1, 1], [], []>} : vector<2x256xbf16>, vector<256x128xbf16>, vector<2x128xf32> -> vector<2x128xf32>
    %c0_34 = arith.constant 0 : index
    %c0_35 = arith.constant 0 : index
    %42 = vector.load %arg6[%c0_34, %c0_35] : memref<128x128xbf16, #tpu.memory_space<vmem>>, vector<128x128xbf16>
    %c0_36 = arith.constant 0 : index
    %c0_37 = arith.constant 0 : index
    %43 = vector.load %arg7[%c0_36, %c0_37] : memref<1x128xf32, #tpu.memory_space<vmem>>, vector<1x128xf32>
    %c0_38 = arith.constant 0 : index
    %c0_39 = arith.constant 0 : index
    %44 = vector.load %arg8[%c0_38, %c0_39] : memref<128x256xbf16, #tpu.memory_space<vmem>>, vector<128x256xbf16>
    %c0_40 = arith.constant 0 : index
    %c0_41 = arith.constant 0 : index
    %45 = vector.load %arg9[%c0_40, %c0_41] : memref<1x256xf32, #tpu.memory_space<vmem>>, vector<1x256xf32>
    %c0_42 = arith.constant 0 : index
    %c0_43 = arith.constant 0 : index
    %46 = vector.load %arg10[%c0_42, %c0_43] : memref<256x128xbf16, #tpu.memory_space<vmem>>, vector<256x128xbf16>
    %c0_44 = arith.constant 0 : index
    %c0_45 = arith.constant 0 : index
    %47 = vector.load %arg11[%c0_44, %c0_45] : memref<1x128xf32, #tpu.memory_space<vmem>>, vector<1x128xf32>
    %48 = arith.truncf %41 : vector<2x128xf32> to vector<2x128xbf16>
    %cst_46 = arith.constant dense<0.000000e+00> : vector<2x128xf32>
    %49 = tpu.matmul %48, %42, %cst_46 {dimension_numbers = #tpu.dot_dimension_numbers<[1], [0], [0], [1], [0, 0, 1, 1], [], []>} : vector<2x128xbf16>, vector<128x128xbf16>, vector<2x128xf32> -> vector<2x128xf32>
    %50 = vector.broadcast %43 : vector<1x128xf32> to vector<2x128xf32>
    %51 = arith.addf %49, %50 : vector<2x128xf32>
    %cst_47 = arith.constant 0.000000e+00 : f32
    %52 = vector.broadcast %cst_47 : f32 to vector<2x128xf32>
    %53 = arith.maximumf %51, %52 : vector<2x128xf32>
    %54 = arith.truncf %53 : vector<2x128xf32> to vector<2x128xbf16>
    %cst_48 = arith.constant dense<0.000000e+00> : vector<2x256xf32>
    %55 = tpu.matmul %54, %44, %cst_48 {dimension_numbers = #tpu.dot_dimension_numbers<[1], [0], [0], [1], [0, 0, 1, 1], [], []>} : vector<2x128xbf16>, vector<128x256xbf16>, vector<2x256xf32> -> vector<2x256xf32>
    %56 = vector.broadcast %45 : vector<1x256xf32> to vector<2x256xf32>
    %57 = arith.addf %55, %56 : vector<2x256xf32>
    %58 = arith.truncf %57 : vector<2x256xf32> to vector<2x256xbf16>
    %cst_49 = arith.constant dense<0.000000e+00> : vector<2x128xf32>
    %59 = tpu.matmul %58, %46, %cst_49 {dimension_numbers = #tpu.dot_dimension_numbers<[1], [0], [0], [1], [0, 0, 1, 1], [], []>} : vector<2x256xbf16>, vector<256x128xbf16>, vector<2x128xf32> -> vector<2x128xf32>
    %60 = vector.broadcast %47 : vector<1x128xf32> to vector<2x128xf32>
    %61 = arith.addf %59, %60 : vector<2x128xf32>
    %cst_50 = arith.constant dense<0xFF800000> : vector<2xf32>
    %62 = vector.multi_reduction <maximumf>, %61, %cst_50 [1] : vector<2x128xf32> to vector<2xf32>
    %63 = vector.shape_cast %62 : vector<2xf32> to vector<2x1xf32>
    %64 = vector.broadcast %63 : vector<2x1xf32> to vector<2x128xf32>
    %65 = arith.subf %61, %64 : vector<2x128xf32>
    %66 = math.exp %65 : vector<2x128xf32>
    %cst_51 = arith.constant dense<0.000000e+00> : vector<2xf32>
    %67 = vector.multi_reduction <add>, %66, %cst_51 [1] : vector<2x128xf32> to vector<2xf32>
    %68 = vector.shape_cast %67 : vector<2xf32> to vector<2x1xf32>
    %69 = math.log %68 : vector<2x1xf32>
    %70 = vector.broadcast %69 : vector<2x1xf32> to vector<2x128xf32>
    %71 = arith.subf %65, %70 : vector<2x128xf32>
    %c0_52 = arith.constant 0 : index
    %c0_53 = arith.constant 0 : index
    %72 = vector.load %arg12[%c0_52, %c0_53] : memref<2x128xf32, #tpu.memory_space<vmem>>, vector<2x128xf32>
    tpu.vector_store %arg12[%c0_52, %c0_53], %71 {strides = array<i32>} : memref<2x128xf32, #tpu.memory_space<vmem>>, vector<2x128xf32>,
    %c0_54 = arith.constant 0 : index
    %c0_55 = arith.constant 0 : index
    %73 = vector.load %arg13[%c0_54, %c0_55] : memref<2x256xf32, #tpu.memory_space<vmem>>, vector<2x256xf32>
    tpu.vector_store %arg13[%c0_54, %c0_55], %57 {strides = array<i32>} : memref<2x256xf32, #tpu.memory_space<vmem>>, vector<2x256xf32>,
    return
  }
  func.func @transform_0(%arg0: i32) -> (i32, i32) {
    %c0_i32 = arith.constant 0 : i32
    %c0_i32_0 = arith.constant 0 : i32
    %c0_i32_1 = arith.constant 0 : i32
    return %c0_i32, %c0_i32_0 : i32, i32
  }
  func.func @transform_1(%arg0: i32) -> (i32, i32) {
    %c0_i32 = arith.constant 0 : i32
    %c0_i32_0 = arith.constant 0 : i32
    %c0_i32_1 = arith.constant 0 : i32
    return %c0_i32, %c0_i32_0 : i32, i32
  }
  func.func @transform_2(%arg0: i32) -> (i32, i32) {
    %c0_i32 = arith.constant 0 : i32
    %c0_i32_0 = arith.constant 0 : i32
    %c0_i32_1 = arith.constant 0 : i32
    return %c0_i32, %c0_i32_0 : i32, i32
  }
  func.func @transform_3(%arg0: i32) -> (i32, i32, i32) {
    %c0_i32 = arith.constant 0 : i32
    %c0_i32_0 = arith.constant 0 : i32
    %c0_i32_1 = arith.constant 0 : i32
    %c0_i32_2 = arith.constant 0 : i32
    return %c0_i32, %c0_i32_0, %c0_i32_1 : i32, i32, i32
  }
  func.func @transform_4(%arg0: i32) -> (i32, i32, i32) {
    %c0_i32 = arith.constant 0 : i32
    %c0_i32_0 = arith.constant 0 : i32
    %c0_i32_1 = arith.constant 0 : i32
    %c0_i32_2 = arith.constant 0 : i32
    return %c0_i32, %c0_i32_0, %c0_i32_1 : i32, i32, i32
  }
  func.func @transform_5(%arg0: i32) -> (i32, i32) {
    %c0_i32 = arith.constant 0 : i32
    %c0_i32_0 = arith.constant 0 : i32
    %c0_i32_1 = arith.constant 0 : i32
    return %c0_i32, %c0_i32_0 : i32, i32
  }
  func.func @transform_6(%arg0: i32) -> (i32, i32) {
    %c0_i32 = arith.constant 0 : i32
    %c0_i32_0 = arith.constant 0 : i32
    %c0_i32_1 = arith.constant 0 : i32
    return %c0_i32, %c0_i32_0 : i32, i32
  }
  func.func @transform_7(%arg0: i32) -> (i32, i32) {
    %c0_i32 = arith.constant 0 : i32
    %c0_i32_0 = arith.constant 0 : i32
    %c0_i32_1 = arith.constant 0 : i32
    return %c0_i32, %c0_i32_0 : i32, i32
  }
  func.func @transform_8(%arg0: i32) -> (i32, i32) {
    %c0_i32 = arith.constant 0 : i32
    %c0_i32_0 = arith.constant 0 : i32
    %c0_i32_1 = arith.constant 0 : i32
    return %c0_i32, %c0_i32_0 : i32, i32
  }
  func.func @transform_9(%arg0: i32) -> (i32, i32) {
    %c0_i32 = arith.constant 0 : i32
    %c0_i32_0 = arith.constant 0 : i32
    %c0_i32_1 = arith.constant 0 : i32
    return %c0_i32, %c0_i32_0 : i32, i32
  }
  func.func @transform_10(%arg0: i32) -> (i32, i32) {
    %c0_i32 = arith.constant 0 : i32
    %c0_i32_0 = arith.constant 0 : i32
    %c0_i32_1 = arith.constant 0 : i32
    return %c0_i32, %c0_i32_0 : i32, i32
  }
  func.func @transform_11(%arg0: i32) -> (i32, i32) {
    %c0_i32 = arith.constant 0 : i32
    %c0_i32_0 = arith.constant 0 : i32
    %c0_i32_1 = arith.constant 0 : i32
    return %c0_i32, %c0_i32_0 : i32, i32
  }
  func.func @transform_12(%arg0: i32) -> (i32, i32) {
    %c0_i32 = arith.constant 0 : i32
    %c0_i32_0 = arith.constant 0 : i32
    %c0_i32_1 = arith.constant 0 : i32
    return %c0_i32, %c0_i32_0 : i32, i32
  }
}

</mosaic_0001>

<llo_original>
// kernel: gcn_forward.1
$region0: #{gcn_forward.1}
  #allocation0 [shape = 'u32[]', space=smem, size = 0x4, offset = 0x4, fixed_abs, tag = 'smem constant byte address 0x4 - core index']
  #allocation1 [shape = 'u32[144,128]{1,0:T(1,128)}', space=vmem, size = 0x12000, scoped, tag = 'internal scratch']
  %s0 = inlined_call_operand.hbm [shape: bf16[256,256], index: 0, kind: input, shape index: {}]
  %s1 = inlined_call_operand.hbm [shape: bf16[256,128], index: 1, kind: input, shape index: {}]
  %s2 = inlined_call_operand.vmem [shape: bf16[2,256], index: 2, kind: input, shape index: {}]
  %s3 = inlined_call_operand.hbm [shape: bf16[3,128,128], index: 3, kind: input, shape index: {}]
  %s4 = inlined_call_operand.vmem [shape: f32[3,1,128], index: 4, kind: input, shape index: {}]
  %s5 = inlined_call_operand.hbm [shape: bf16[128,128], index: 5, kind: input, shape index: {}]
  %s6 = inlined_call_operand.vmem [shape: f32[1,128], index: 6, kind: input, shape index: {}]
  %s7 = inlined_call_operand.hbm [shape: bf16[128,256], index: 7, kind: input, shape index: {}]
  %s8 = inlined_call_operand.vmem [shape: f32[1,256], index: 8, kind: input, shape index: {}]
  %s9 = inlined_call_operand.hbm [shape: bf16[256,128], index: 9, kind: input, shape index: {}]
  %s10 = inlined_call_operand.vmem [shape: f32[1,128], index: 10, kind: input, shape index: {}]
  %s11 = inlined_call_operand.hbm [shape: f32[2,128], index: 11, kind: output, shape index: {0}]
  %s12 = inlined_call_operand.hbm [shape: f32[2,256], index: 12, kind: output, shape index: {1}]
  %13 = xla_tuple %s11, %s12
  %s14 = sld [smem:[#allocation0]]
  $region86: #{gcn_forward.1} parent=0
    _
  %s16 = ssub.s32 1, %s14
  %s17 = scalar_select 0, %s16, %s14
  $region1: #{gcn_forward.1} parent=0
    #allocation2 [shape = 'u8[131072]{0}', space=vmem, size = 0x20000, scoped, tag = 'input window, operand 0, single buffered']
    #allocation3 [shape = 's32[1]{0}', space=sflag, size = 0x4, scoped, tag = 'scoped memory for gcn_forward.1']
    #allocation4 [shape = 's32[1]{0}', space=sflag, size = 0x4, scoped, tag = 'scoped memory for gcn_forward.1']
    #allocation5 [shape = 'u8[65536]{0}', space=vmem, size = 0x10000, scoped, tag = 'input window, operand 1, single buffered']
    #allocation6 [shape = 's32[1]{0}', space=sflag, size = 0x4, scoped, tag = 'scoped memory for gcn_forward.1']
    #allocation7 [shape = 'u8[98304]{0}', space=vmem, size = 0x18000, scoped, tag = 'input window, operand 3, single buffered']
    #allocation8 [shape = 'u8[32768]{0}', space=vmem, size = 0x8000, scoped, tag = 'input window, operand 5, single buffered']
    #allocation9 [shape = 's32[1]{0}', space=sflag, size = 0x4, scoped, tag = 'scoped memory for gcn_forward.1']
    #allocation10 [shape = 'u8[65536]{0}', space=vmem, size = 0x10000, scoped, tag = 'input window, operand 7, single buffered']
    #allocation11 [shape = 'u8[65536]{0}', space=vmem, size = 0x10000, scoped, tag = 'input window, operand 9, single buffered']
    #allocation12 [shape = 's32[1]{0}', space=sflag, size = 0x4, scoped, tag = 'scoped memory for gcn_forward.1']
    #allocation13 [shape = 'u8[1024]{0}', space=vmem, size = 0x400, scoped, tag = 'output window, operand 0, single buffered']
    #allocation14 [shape = 'u8[2048]{0}', space=vmem, size = 0x800, scoped, tag = 'output window, operand 1, single buffered']
    #allocation15 [shape = 's32[1]{0}', space=sflag, size = 0x4, scoped, tag = 'scoped memory for gcn_forward.1']
    %18 = vsyncpa [#allocation3], 0
    %19 = vsyncpa [#allocation6], 0
    %20 = vsyncpa [#allocation9], 0
    %21 = vsyncpa [#allocation12], 0
    %22 = vsyncpa [#allocation4], 0
    %23 = vsyncpa [#allocation15], 0
    // Predicated region
    $region2: #{gcn_forward.1} parent=1 // pred_check
      _
    $region3: #{gcn_forward.1} parent=1 // pred_check_branch
      %25 = sbr.rel (0) target = $region5
    $region4: #{gcn_forward.1} parent=1 // pred_region
      %s27 = ssub.s32 4096, 4096
      %28 = vsyncadd [#allocation3], %s27
      %s29 = sshll.u32 [#allocation2], 4
      %s30 = int_to_ptr.vmem [resolvable:$true] %s29
      %35 = dma.hbm_to_vmem [thread:$0]  %s0, 4096, %s30, [#allocation3], 128, 128, 8
    $region5: #{gcn_forward.1} parent=1 // pred_fallthru
      _
    // Predicated region
    $region6: #{gcn_forward.1} parent=1 // pred_check
      _
    $region7: #{gcn_forward.1} parent=1 // pred_check_branch
      %37 = sbr.rel (0) target = $region9
    $region8: #{gcn_forward.1} parent=1 // pred_region
      %s39 = ssub.s32 2048, 2048
      %40 = vsyncadd [#allocation6], %s39
      %s41 = sshll.u32 [#allocation5], 4
      %s42 = int_to_ptr.vmem [resolvable:$true] %s41
      %47 = dma.hbm_to_vmem [thread:$0]  %s1, 2048, %s42, [#allocation6], 64, 64, 4
    $region9: #{gcn_forward.1} parent=1 // pred_fallthru
      _
    // Predicated region
    $region10: #{gcn_forward.1} parent=1 // pred_check
      _
    $region11: #{gcn_forward.1} parent=1 // pred_check_branch
      %49 = sbr.rel (0) target = $region13
    $region12: #{gcn_forward.1} parent=1 // pred_region
      _
    $region13: #{gcn_forward.1} parent=1 // pred_fallthru
      _
    // Predicated region
    $region14: #{gcn_forward.1} parent=1 // pred_check
      _
    $region15: #{gcn_forward.1} parent=1 // pred_check_branch
      %51 = sbr.rel (0) target = $region17
    $region16: #{gcn_forward.1} parent=1 // pred_region
      %s53 = ssub.s32 3072, 3072
      %54 = vsyncadd [#allocation6], %s53
      %s55 = sshll.u32 [#allocation7], 4
      %s56 = int_to_ptr.vmem [resolvable:$true] %s55
      %61 = dma.hbm_to_vmem [thread:$0]  %s3, 3072, %s56, [#allocation6], 64, 64, 4
    $region17: #{gcn_forward.1} parent=1 // pred_fallthru
      _
    // Predicated region
    $region18: #{gcn_forward.1} parent=1 // pred_check
      _
    $region19: #{gcn_forward.1} parent=1 // pred_check_branch
      %63 = sbr.rel (0) target = $region21
    $region20: #{gcn_forward.1} parent=1 // pred_region
      _
    $region21: #{gcn_forward.1} parent=1 // pred_fallthru
      _
    // Predicated region
    $region22: #{gcn_forward.1} parent=1 // pred_check
      _
    $region23: #{gcn_forward.1} parent=1 // pred_check_branch
      %65 = sbr.rel (0) target = $region25
    $region24: #{gcn_forward.1} parent=1 // pred_region
      %s67 = ssub.s32 1024, 1024
      %68 = vsyncadd [#allocation9], %s67
      %s69 = sshll.u32 [#allocation8], 4
      %s70 = int_to_ptr.vmem [resolvable:$true] %s69
      %75 = dma.hbm_to_vmem [thread:$0]  %s5, 1024, %s70, [#allocation9], 64, 64, 4
    $region25: #{gcn_forward.1} parent=1 // pred_fallthru
      _
    // Predicated region
    $region26: #{gcn_forward.1} parent=1 // pred_check
      _
    $region27: #{gcn_forward.1} parent=1 // pred_check_branch
      %77 = sbr.rel (0) target = $region29
    $region28: #{gcn_forward.1} parent=1 // pred_region
      _
    $region29: #{gcn_forward.1} parent=1 // pred_fallthru
      _
    // Predicated region
    $region30: #{gcn_forward.1} parent=1 // pred_check
      _
    $region31: #{gcn_forward.1} parent=1 // pred_check_branch
      %79 = sbr.rel (0) target = $region33
    $region32: #{gcn_forward.1} parent=1 // pred_region
      %s81 = ssub.s32 2048, 2048
      %82 = vsyncadd [#allocation9], %s81
      %s83 = sshll.u32 [#allocation10], 4
      %s84 = int_to_ptr.vmem [resolvable:$true] %s83
      %89 = dma.hbm_to_vmem [thread:$0]  %s7, 2048, %s84, [#allocation9], 128, 128, 8
    $region33: #{gcn_forward.1} parent=1 // pred_fallthru
      _
    // Predicated region
    $region34: #{gcn_forward.1} parent=1 // pred_check
      _
    $region35: #{gcn_forward.1} parent=1 // pred_check_branch
      %91 = sbr.rel (0) target = $region37
    $region36: #{gcn_forward.1} parent=1 // pred_region
      _
    $region37: #{gcn_forward.1} parent=1 // pred_fallthru
      _
    // Predicated region
    $region38: #{gcn_forward.1} parent=1 // pred_check
      _
    $region39: #{gcn_forward.1} parent=1 // pred_check_branch
      %93 = sbr.rel (0) target = $region41
    $region40: #{gcn_forward.1} parent=1 // pred_region
      %s95 = ssub.s32 2048, 2048
      %96 = vsyncadd [#allocation12], %s95
      %s97 = sshll.u32 [#allocation11], 4
      %s98 = int_to_ptr.vmem [resolvable:$true] %s97
      %103 = dma.hbm_to_vmem [thread:$0]  %s9, 2048, %s98, [#allocation12], 64, 64, 4
    $region41: #{gcn_forward.1} parent=1 // pred_fallthru
      _
    // Predicated region
    $region42: #{gcn_forward.1} parent=1 // pred_check
      _
    $region43: #{gcn_forward.1} parent=1 // pred_check_branch
      %105 = sbr.rel (0) target = $region45
    $region44: #{gcn_forward.1} parent=1 // pred_region
      _
    $region45: #{gcn_forward.1} parent=1 // pred_fallthru
      _
    // Predicated region
    $region46: #{gcn_forward.1} parent=1 // pred_check
      _
    $region47: #{gcn_forward.1} parent=1 // pred_check_branch
      %107 = sbr.rel (0) target = $region49
    $region48: #{gcn_forward.1} parent=1 // pred_region
      %108 = dma.done [#allocation3], 4096
    $region49: #{gcn_forward.1} parent=1 // pred_fallthru
      _
    // Predicated region
    $region50: #{gcn_forward.1} parent=1 // pred_check
      _
    $region51: #{gcn_forward.1} parent=1 // pred_check_branch
      %110 = sbr.rel (0) target = $region53
    $region52: #{gcn_forward.1} parent=1 // pred_region
      %111 = dma.done [#allocation6], 2048
    $region53: #{gcn_forward.1} parent=1 // pred_fallthru
      _
    // Predicated region
    $region54: #{gcn_forward.1} parent=1 // pred_check
      _
    $region55: #{gcn_forward.1} parent=1 // pred_check_branch
      %113 = sbr.rel (0) target = $region57
    $region56: #{gcn_forward.1} parent=1 // pred_region
      %114 = dma.done [#allocation6], 3072
    $region57: #{gcn_forward.1} parent=1 // pred_fallthru
      _
    // Predicated region
    $region58: #{gcn_forward.1} parent=1 // pred_check
      _
    $region59: #{gcn_forward.1} parent=1 // pred_check_branch
      %116 = sbr.rel (0) target = $region61
    $region60: #{gcn_forward.1} parent=1 // pred_region
      %117 = dma.done [#allocation9], 1024
    $region61: #{gcn_forward.1} parent=1 // pred_fallthru
      _
    // Predicated region
    $region62: #{gcn_forward.1} parent=1 // pred_check
      _
    $region63: #{gcn_forward.1} parent=1 // pred_check_branch
      %119 = sbr.rel (0) target = $region65
    $region64: #{gcn_forward.1} parent=1 // pred_region
      %120 = dma.done [#allocation9], 2048
    $region65: #{gcn_forward.1} parent=1 // pred_fallthru
      _
    // Predicated region
    $region66: #{gcn_forward.1} parent=1 // pred_check
      _
    $region67: #{gcn_forward.1} parent=1 // pred_check_branch
      %122 = sbr.rel (0) target = $region69
    $region68: #{gcn_forward.1} parent=1 // pred_region
      %123 = dma.done [#allocation12], 2048
    $region69: #{gcn_forward.1} parent=1 // pred_fallthru
      _
    %v125 = vld [vmem:[#allocation5] sm:$0xf]
    %v126 = vld [vmem:[#allocation5 + $0x4] sm:$0xf]
    %v127 = vld [vmem:[#allocation5 + $0x8] sm:$0xf]
    %v128 = vld [vmem:[#allocation5 + $0xc] sm:$0xf]
    %v129 = vld [vmem:[#allocation5 + $0x10] sm:$0xf]
    %v130 = vld [vmem:[#allocation5 + $0x14] sm:$0xf]
    %v131 = vld [vmem:[#allocation5 + $0x18] sm:$0xf]
    %v132 = vld [vmem:[#allocation5 + $0x1c] sm:$0xf]
    %v133 = vld [vmem:[#allocation5 + $0x20] sm:$0xf]
    %v134 = vld [vmem:[#allocation5 + $0x24] sm:$0xf]
    %v135 = vld [vmem:[#allocation5 + $0x28] sm:$0xf]
    %v136 = vld [vmem:[#allocation5 + $0x2c] sm:$0xf]
    %v137 = vld [vmem:[#allocation5 + $0x30] sm:$0xf]
    %v138 = vld [vmem:[#allocation5 + $0x34] sm:$0xf]
    %v139 = vld [vmem:[#allocation5 + $0x38] sm:$0xf]
    %v140 = vld [vmem:[#allocation5 + $0x3c] sm:$0xf]
    %v141 = vld [vmem:[#allocation5 + $0x40] sm:$0xf]
    %v142 = vld [vmem:[#allocation5 + $0x44] sm:$0xf]
    %v143 = vld [vmem:[#allocation5 + $0x48] sm:$0xf]
    %v144 = vld [vmem:[#allocation5 + $0x4c] sm:$0xf]
    %v145 = vld [vmem:[#allocation5 + $0x50] sm:$0xf]
    %v146 = vld [vmem:[#allocation5 + $0x54] sm:$0xf]
    %v147 = vld [vmem:[#allocation5 + $0x58] sm:$0xf]
    %v148 = vld [vmem:[#allocation5 + $0x5c] sm:$0xf]
    %v149 = vld [vmem:[#allocation5 + $0x60] sm:$0xf]
    %v150 = vld [vmem:[#allocation5 + $0x64] sm:$0xf]
    %v151 = vld [vmem:[#allocation5 + $0x68] sm:$0xf]
    %v152 = vld [vmem:[#allocation5 + $0x6c] sm:$0xf]
    %v153 = vld [vmem:[#allocation5 + $0x70] sm:$0xf]
    %v154 = vld [vmem:[#allocation5 + $0x74] sm:$0xf]
    %v155 = vld [vmem:[#allocation5 + $0x78] sm:$0xf]
    %v156 = vld [vmem:[#allocation5 + $0x7c] sm:$0xf]
    %v157 = vld [vmem:[#allocation2] sm:$0xff]
    %v158 = vld [vmem:[#allocation2 + $0x8] sm:$0xff]
    %v159 = vld [vmem:[#allocation2 + $0x10] sm:$0xff]
    %v160 = vld [vmem:[#allocation2 + $0x18] sm:$0xff]
    %v161 = vld [vmem:[#allocation2 + $0x20] sm:$0xff]
    %v162 = vld [vmem:[#allocation2 + $0x28] sm:$0xff]
    %v163 = vld [vmem:[#allocation2 + $0x30] sm:$0xff]
    %v164 = vld [vmem:[#allocation2 + $0x38] sm:$0xff]
    %v165 = vld [vmem:[#allocation2 + $0x40] sm:$0xff]
    %v166 = vld [vmem:[#allocation2 + $0x48] sm:$0xff]
    %v167 = vld [vmem:[#allocation2 + $0x50] sm:$0xff]
    %v168 = vld [vmem:[#allocation2 + $0x58] sm:$0xff]
    %v169 = vld [vmem:[#allocation2 + $0x60] sm:$0xff]
    %v170 = vld [vmem:[#allocation2 + $0x68] sm:$0xff]
    %v171 = vld [vmem:[#allocation2 + $0x70] sm:$0xff]
    %v172 = vld [vmem:[#allocation2 + $0x78] sm:$0xff]
    %v173 = vld [vmem:[#allocation2 + $0x80] sm:$0xff]
    %v174 = vld [vmem:[#allocation2 + $0x88] sm:$0xff]
    %v175 = vld [vmem:[#allocation2 + $0x90] sm:$0xff]
    %v176 = vld [vmem:[#allocation2 + $0x98] sm:$0xff]
    %v177 = vld [vmem:[#allocation2 + $0xa0] sm:$0xff]
    %v178 = vld [vmem:[#allocation2 + $0xa8] sm:$0xff]
    %v179 = vld [vmem:[#allocation2 + $0xb0] sm:$0xff]
    %v180 = vld [vmem:[#allocation2 + $0xb8] sm:$0xff]
    %v181 = vld [vmem:[#allocation2 + $0xc0] sm:$0xff]
    %v182 = vld [vmem:[#allocation2 + $0xc8] sm:$0xff]
    %v183 = vld [vmem:[#allocation2 + $0xd0] sm:$0xff]
    %v184 = vld [vmem:[#allocation2 + $0xd8] sm:$0xff]
    %v185 = vld [vmem:[#allocation2 + $0xe0] sm:$0xff]
    %v186 = vld [vmem:[#allocation2 + $0xe8] sm:$0xff]
    %v187 = vld [vmem:[#allocation2 + $0xf0] sm:$0xff]
    %v188 = vld [vmem:[#allocation2 + $0xf8] sm:$0xff]
    %v221 = vunpack.c.l.b16 %v157
    %v222 = vunpack.c.h.b16 %v157
    %v223 = vunpack.c.l.b16 %v158
    %v224 = vunpack.c.h.b16 %v158
    %v225 = vunpack.c.l.b16 %v159
    %v226 = vunpack.c.h.b16 %v159
    %v227 = vunpack.c.l.b16 %v160
    %v228 = vunpack.c.h.b16 %v160
    %v229 = vunpack.c.l.b16 %v161
    %v230 = vunpack.c.h.b16 %v161
    %v231 = vunpack.c.l.b16 %v162
    %v232 = vunpack.c.h.b16 %v162
    %v233 = vunpack.c.l.b16 %v163
    %v234 = vunpack.c.h.b16 %v163
    %v235 = vunpack.c.l.b16 %v164
    %v236 = vunpack.c.h.b16 %v164
    %v237 = vunpack.c.l.b16 %v165
    %v238 = vunpack.c.h.b16 %v165
    %v239 = vunpack.c.l.b16 %v166
    %v240 = vunpack.c.h.b16 %v166
    %v241 = vunpack.c.l.b16 %v167
    %v242 = vunpack.c.h.b16 %v167
    %v243 = vunpack.c.l.b16 %v168
    %v244 = vunpack.c.h.b16 %v168
    %v245 = vunpack.c.l.b16 %v169
    %v246 = vunpack.c.h.b16 %v169
    %v247 = vunpack.c.l.b16 %v170
    %v248 = vunpack.c.h.b16 %v170
    %v249 = vunpack.c.l.b16 %v171
    %v250 = vunpack.c.h.b16 %v171
    %v251 = vunpack.c.l.b16 %v172
    %v252 = vunpack.c.h.b16 %v172
    %v253 = vunpack.c.l.b16 %v173
    %v254 = vunpack.c.h.b16 %v173
    %v255 = vunpack.c.l.b16 %v174
    %v256 = vunpack.c.h.b16 %v174
    %v257 = vunpack.c.l.b16 %v175
    %v258 = vunpack.c.h.b16 %v175
    %v259 = vunpack.c.l.b16 %v176
    %v260 = vunpack.c.h.b16 %v176
    %v261 = vunpack.c.l.b16 %v177
    %v262 = vunpack.c.h.b16 %v177
    %v263 = vunpack.c.l.b16 %v178
    %v264 = vunpack.c.h.b16 %v178
    %v265 = vunpack.c.l.b16 %v179
    %v266 = vunpack.c.h.b16 %v179
    %v267 = vunpack.c.l.b16 %v180
    %v268 = vunpack.c.h.b16 %v180
    %v269 = vunpack.c.l.b16 %v181
    %v270 = vunpack.c.h.b16 %v181
    %v271 = vunpack.c.l.b16 %v182
    %v272 = vunpack.c.h.b16 %v182
    %v273 = vunpack.c.l.b16 %v183
    %v274 = vunpack.c.h.b16 %v183
    %v275 = vunpack.c.l.b16 %v184
    %v276 = vunpack.c.h.b16 %v184
    %v277 = vunpack.c.l.b16 %v185
    %v278 = vunpack.c.h.b16 %v185
    %v279 = vunpack.c.l.b16 %v186
    %v280 = vunpack.c.h.b16 %v186
    %v281 = vunpack.c.l.b16 %v187
    %v282 = vunpack.c.h.b16 %v187
    %v283 = vunpack.c.l.b16 %v188
    %v284 = vunpack.c.h.b16 %v188
    %v285 = vpack.c.b16 %v223, %v221
    %v286 = vpack.c.b16 %v224, %v222
    %v287 = vpack.c.b16 %v227, %v225
    %v288 = vpack.c.b16 %v228, %v226
    %v289 = vpack.c.b16 %v231, %v229
    %v290 = vpack.c.b16 %v232, %v230
    %v291 = vpack.c.b16 %v235, %v233
    %v292 = vpack.c.b16 %v236, %v234
    %v293 = vpack.c.b16 %v239, %v237
    %v294 = vpack.c.b16 %v240, %v238
    %v295 = vpack.c.b16 %v243, %v241
    %v296 = vpack.c.b16 %v244, %v242
    %v297 = vpack.c.b16 %v247, %v245
    %v298 = vpack.c.b16 %v248, %v246
    %v299 = vpack.c.b16 %v251, %v249
    %v300 = vpack.c.b16 %v252, %v250
    %v301 = vpack.c.b16 %v255, %v253
    %v302 = vpack.c.b16 %v256, %v254
    %v303 = vpack.c.b16 %v259, %v257
    %v304 = vpack.c.b16 %v260, %v258
    %v305 = vpack.c.b16 %v263, %v261
    %v306 = vpack.c.b16 %v264, %v262
    %v307 = vpack.c.b16 %v267, %v265
    %v308 = vpack.c.b16 %v268, %v266
    %v309 = vpack.c.b16 %v271, %v269
    %v310 = vpack.c.b16 %v272, %v270
    %v311 = vpack.c.b16 %v275, %v273
    %v312 = vpack.c.b16 %v276, %v274
    %v313 = vpack.c.b16 %v279, %v277
    %v314 = vpack.c.b16 %v280, %v278
    %v315 = vpack.c.b16 %v283, %v281
    %v316 = vpack.c.b16 %v284, %v282
    %v381 = vunpack.c.l.b16 %v125
    %v382 = vunpack.c.l.b16 %v126
    %v383 = vunpack.c.l.b16 %v127
    %v384 = vunpack.c.l.b16 %v128
    %v385 = vunpack.c.l.b16 %v129
    %v386 = vunpack.c.l.b16 %v130
    %v387 = vunpack.c.l.b16 %v131
    %v388 = vunpack.c.l.b16 %v132
    %v389 = vunpack.c.l.b16 %v133
    %v390 = vunpack.c.l.b16 %v134
    %v391 = vunpack.c.l.b16 %v135
    %v392 = vunpack.c.l.b16 %v136
    %v393 = vunpack.c.l.b16 %v137
    %v394 = vunpack.c.l.b16 %v138
    %v395 = vunpack.c.l.b16 %v139
    %v396 = vunpack.c.l.b16 %v140
    %v397 = vunpack.c.l.b16 %v141
    %v398 = vunpack.c.l.b16 %v142
    %v399 = vunpack.c.l.b16 %v143
    %v400 = vunpack.c.l.b16 %v144
    %v401 = vunpack.c.l.b16 %v145
    %v402 = vunpack.c.l.b16 %v146
    %v403 = vunpack.c.l.b16 %v147
    %v404 = vunpack.c.l.b16 %v148
    %v405 = vunpack.c.l.b16 %v149
    %v406 = vunpack.c.l.b16 %v150
    %v407 = vunpack.c.l.b16 %v151
    %v408 = vunpack.c.l.b16 %v152
    %v409 = vunpack.c.l.b16 %v153
    %v410 = vunpack.c.l.b16 %v154
    %v411 = vunpack.c.l.b16 %v155
    %v412 = vunpack.c.l.b16 %v156
    %v413 = vpack.c.b16 %v382, %v381
    %v414 = vpack.c.b16 %v384, %v383
    %v415 = vpack.c.b16 %v386, %v385
    %v416 = vpack.c.b16 %v388, %v387
    %v417 = vpack.c.b16 %v390, %v389
    %v418 = vpack.c.b16 %v392, %v391
    %v419 = vpack.c.b16 %v394, %v393
    %v420 = vpack.c.b16 %v396, %v395
    %v421 = vpack.c.b16 %v398, %v397
    %v422 = vpack.c.b16 %v400, %v399
    %v423 = vpack.c.b16 %v402, %v401
    %v424 = vpack.c.b16 %v404, %v403
    %v425 = vpack.c.b16 %v406, %v405
    %v426 = vpack.c.b16 %v408, %v407
    %v427 = vpack.c.b16 %v410, %v409
    %v428 = vpack.c.b16 %v412, %v411
    %445 = vmatprep.subr.bf16.mxu0 0
    %446 = vmatpush1.bf16.msra.mxu0 %v413
    %447 = vmatprep.subr.bf16.mxu0 0
    %448 = vmatpush1.bf16.msra.mxu0 %v414
    %449 = vmatprep.subr.bf16.mxu0 0
    %450 = vmatpush1.bf16.msra.mxu0 %v415
    %451 = vmatprep.subr.bf16.mxu0 0
    %452 = vmatpush1.bf16.msra.mxu0 %v416
    %453 = vmatprep.subr.bf16.mxu0 0
    %454 = vmatpush1.bf16.msra.mxu0 %v417
    %455 = vmatprep.subr.bf16.mxu0 0
    %456 = vmatpush1.bf16.msra.mxu0 %v418
    %457 = vmatprep.subr.bf16.mxu0 0
    %458 = vmatpush1.bf16.msra.mxu0 %v419
    %459 = vmatprep.subr.bf16.mxu0 0
    %460 = vmatpush1.bf16.msra.mxu0 %v420
    %461 = vmatprep.subr.bf16.mxu0 0
    %462 = vmatpush1.bf16.msra.mxu0 %v421
    %463 = vmatprep.subr.bf16.mxu0 0
    %464 = vmatpush1.bf16.msra.mxu0 %v422
    %465 = vmatprep.subr.bf16.mxu0 0
    %466 = vmatpush1.bf16.msra.mxu0 %v423
    %467 = vmatprep.subr.bf16.mxu0 0
    %468 = vmatpush1.bf16.msra.mxu0 %v424
    %469 = vmatprep.subr.bf16.mxu0 0
    %470 = vmatpush1.bf16.msra.mxu0 %v425
    %471 = vmatprep.subr.bf16.mxu0 0
    %472 = vmatpush1.bf16.msra.mxu0 %v426
    %473 = vmatprep.subr.bf16.mxu0 0
    %474 = vmatpush1.bf16.msra.mxu0 %v427
    %475 = vmatprep.subr.bf16.mxu0 0
    %476 = vmatpush1.bf16.msra.mxu0 %v428
    %477 = vmatprep.mubr.bf16.mxu0 %v286
    %478 = vmatmul.mubr.bf16.gmra.mrb[0].mxu0 %v285
    %v479 = vpop.f32.mrb[0].mxu0
    %v480 = vadd.f32 0.0, %v479
    %v481 = vpop.f32.mrb[0].mxu0
    %v482 = vpop.f32.mrb[0].mxu0
    %v483 = vadd.f32 0.0, %v482
    %v484 = vpop.f32.mrb[0].mxu0
    %485 = vmatprep.mubr.bf16.mxu0 %v288
    %486 = vmatmul.mubr.bf16.gmra.mrb[0].mxu0 %v287
    %v487 = vpop.f32.mrb[0].mxu0
    %v488 = vadd.f32 0.0, %v487
    %v489 = vpop.f32.mrb[0].mxu0
    %v490 = vpop.f32.mrb[0].mxu0
    %v491 = vadd.f32 0.0, %v490
    %v492 = vpop.f32.mrb[0].mxu0
    %493 = vmatprep.mubr.bf16.mxu0 %v290
    %494 = vmatmul.mubr.bf16.gmra.mrb[0].mxu0 %v289
    %v495 = vpop.f32.mrb[0].mxu0
    %v496 = vadd.f32 0.0, %v495
    %v497 = vpop.f32.mrb[0].mxu0
    %v498 = vpop.f32.mrb[0].mxu0
    %v499 = vadd.f32 0.0, %v498
    %v500 = vpop.f32.mrb[0].mxu0
    %501 = vmatprep.mubr.bf16.mxu0 %v292
    %502 = vmatmul.mubr.bf16.gmra.mrb[0].mxu0 %v291
    %v503 = vpop.f32.mrb[0].mxu0
    %v504 = vadd.f32 0.0, %v503
    %v505 = vpop.f32.mrb[0].mxu0
    %v506 = vpop.f32.mrb[0].mxu0
    %v507 = vadd.f32 0.0, %v506
    %v508 = vpop.f32.mrb[0].mxu0
    %509 = vmatprep.mubr.bf16.mxu0 %v294
    %510 = vmatmul.mubr.bf16.gmra.mrb[0].mxu0 %v293
    %v511 = vpop.f32.mrb[0].mxu0
    %v512 = vadd.f32 0.0, %v511
    %v513 = vpop.f32.mrb[0].mxu0
    %v514 = vpop.f32.mrb[0].mxu0
    %v515 = vadd.f32 0.0, %v514
    %v516 = vpop.f32.mrb[0].mxu0
    %517 = vmatprep.mubr.bf16.mxu0 %v296
    %518 = vmatmul.mubr.bf16.gmra.mrb[0].mxu0 %v295
    %v519 = vpop.f32.mrb[0].mxu0
    %v520 = vadd.f32 0.0, %v519
    %v521 = vpop.f32.mrb[0].mxu0
    %v522 = vpop.f32.mrb[0].mxu0
    %v523 = vadd.f32 0.0, %v522
    %v524 = vpop.f32.mrb[0].mxu0
    %525 = vmatprep.mubr.bf16.mxu0 %v298
    %526 = vmatmul.mubr.bf16.gmra.mrb[0].mxu0 %v297
    %v527 = vpop.f32.mrb[0].mxu0
    %v528 = vadd.f32 0.0, %v527
    %v529 = vpop.f32.mrb[0].mxu0
    %v530 = vpop.f32.mrb[0].mxu0
    %v531 = vadd.f32 0.0, %v530
    %v532 = vpop.f32.mrb[0].mxu0
    %533 = vmatprep.mubr.bf16.mxu0 %v300
    %534 = vmatmul.mubr.bf16.gmra.mrb[0].mxu0 %v299
    %v535 = vpop.f32.mrb[0].mxu0
    %v536 = vadd.f32 0.0, %v535
    %v537 = vpop.f32.mrb[0].mxu0
    %v538 = vpop.f32.mrb[0].mxu0
    %v539 = vadd.f32 0.0, %v538
    %v540 = vpop.f32.mrb[0].mxu0
    %541 = vmatprep.mubr.bf16.mxu0 %v302
    %542 = vmatmul.mubr.bf16.gmra.mrb[0].mxu0 %v301
    %v543 = vpop.f32.mrb[0].mxu0
    %v544 = vadd.f32 0.0, %v543
    %v545 = vpop.f32.mrb[0].mxu0
    %v546 = vpop.f32.mrb[0].mxu0
    %v547 = vadd.f32 0.0, %v546
    %v548 = vpop.f32.mrb[0].mxu0
    %549 = vmatprep.mubr.bf16.mxu0 %v304
    %550 = vmatmul.mubr.bf16.gmra.mrb[0].mxu0 %v303
    %v551 = vpop.f32.mrb[0].mxu0
    %v552 = vadd.f32 0.0, %v551
    %v553 = vpop.f32.mrb[0].mxu0
    %v554 = vpop.f32.mrb[0].mxu0
    %v555 = vadd.f32 0.0, %v554
    %v556 = vpop.f32.mrb[0].mxu0
    %557 = vmatprep.mubr.bf16.mxu0 %v306
    %558 = vmatmul.mubr.bf16.gmra.mrb[0].mxu0 %v305
    %v559 = vpop.f32.mrb[0].mxu0
    %v560 = vadd.f32 0.0, %v559
    %v561 = vpop.f32.mrb[0].mxu0
    %v562 = vpop.f32.mrb[0].mxu0
    %v563 = vadd.f32 0.0, %v562
    %v564 = vpop.f32.mrb[0].mxu0
    %565 = vmatprep.mubr.bf16.mxu0 %v308
    %566 = vmatmul.mubr.bf16.gmra.mrb[0].mxu0 %v307
    %v567 = vpop.f32.mrb[0].mxu0
    %v568 = vadd.f32 0.0, %v567
    %v569 = vpop.f32.mrb[0].mxu0
    %v570 = vpop.f32.mrb[0].mxu0
    %v571 = vadd.f32 0.0, %v570
    %v572 = vpop.f32.mrb[0].mxu0
    %573 = vmatprep.mubr.bf16.mxu0 %v310
    %574 = vmatmul.mubr.bf16.gmra.mrb[0].mxu0 %v309
    %v575 = vpop.f32.mrb[0].mxu0
    %v576 = vadd.f32 0.0, %v575
    %v577 = vpop.f32.mrb[0].mxu0
    %v578 = vpop.f32.mrb[0].mxu0
    %v579 = vadd.f32 0.0, %v578
    %v580 = vpop.f32.mrb[0].mxu0
    %581 = vmatprep.mubr.bf16.mxu0 %v312
    %582 = vmatmul.mubr.bf16.gmra.mrb[0].mxu0 %v311
    %v583 = vpop.f32.mrb[0].mxu0
    %v584 = vadd.f32 0.0, %v583
    %v585 = vpop.f32.mrb[0].mxu0
    %v586 = vpop.f32.mrb[0].mxu0
    %v587 = vadd.f32 0.0, %v586
    %v588 = vpop.f32.mrb[0].mxu0
    %589 = vmatprep.mubr.bf16.mxu0 %v314
    %590 = vmatmul.mubr.bf16.gmra.mrb[0].mxu0 %v313
    %v591 = vpop.f32.mrb[0].mxu0
    %v592 = vadd.f32 0.0, %v591
    %v593 = vpop.f32.mrb[0].mxu0
    %v594 = vpop.f32.mrb[0].mxu0
    %v595 = vadd.f32 0.0, %v594
    %v596 = vpop.f32.mrb[0].mxu0
    %597 = vmatprep.mubr.bf16.mxu0 %v316
    %598 = vmatmul.mubr.bf16.gmra.mrb[0].mxu0 %v315
    %v599 = vpop.f32.mrb[0].mxu0
    %v600 = vadd.f32 0.0, %v599
    %v601 = vpop.f32.mrb[0].mxu0
    %v602 = vpop.f32.mrb[0].mxu0
    %v603 = vadd.f32 0.0, %v602
    %v604 = vpop.f32.mrb[0].mxu0
    %605 = vdwg.mxu0
    %v606 = vpack.c.bf16 %v483, %v480
    %v607 = vpack.c.bf16 %v491, %v488
    %v608 = vpack.c.bf16 %v499, %v496
    %v609 = vpack.c.bf16 %v507, %v504
    %v610 = vpack.c.bf16 %v515, %v512
    %v611 = vpack.c.bf16 %v523, %v520
    %v612 = vpack.c.bf16 %v531, %v528
    %v613 = vpack.c.bf16 %v539, %v536
    %v614 = vpack.c.bf16 %v547, %v544
    %v615 = vpack.c.bf16 %v555, %v552
    %v616 = vpack.c.bf16 %v563, %v560
    %v617 = vpack.c.bf16 %v571, %v568
    %v618 = vpack.c.bf16 %v579, %v576
    %v619 = vpack.c.bf16 %v587, %v584
    %v620 = vpack.c.bf16 %v595, %v592
    %v621 = vpack.c.bf16 %v603, %v600
    %v622 = vld [vmem:[#allocation7] sm:$0xf]
    %v623 = vld [vmem:[#allocation7 + $0x4] sm:$0xf]
    %v624 = vld [vmem:[#allocation7 + $0x8] sm:$0xf]
    %v625 = vld [vmem:[#allocation7 + $0xc] sm:$0xf]
    %v626 = vld [vmem:[#allocation7 + $0x10] sm:$0xf]
    %v627 = vld [vmem:[#allocation7 + $0x14] sm:$0xf]
    %v628 = vld [vmem:[#allocation7 + $0x18] sm:$0xf]
    %v629 = vld [vmem:[#allocation7 + $0x1c] sm:$0xf]
    %v630 = vld [vmem:[#allocation7 + $0x20] sm:$0xf]
    %v631 = vld [vmem:[#allocation7 + $0x24] sm:$0xf]
    %v632 = vld [vmem:[#allocation7 + $0x28] sm:$0xf]
    %v633 = vld [vmem:[#allocation7 + $0x2c] sm:$0xf]
    %v634 = vld [vmem:[#allocation7 + $0x30] sm:$0xf]
    %v635 = vld [vmem:[#allocation7 + $0x34] sm:$0xf]
    %v636 = vld [vmem:[#allocation7 + $0x38] sm:$0xf]
    %v637 = vld [vmem:[#allocation7 + $0x3c] sm:$0xf]
    %v638 = vld [vmem:[%s4] sm:$0x1]
    %v640 = vlaneseq
    %v641 = vshrl.u32 %v640, 7
    %v642 = vsub.s32 0, %v641
    %v643 = vrot.slane %v638, %v642
    %v661 = vunpack.c.l.b16 %v622
    %v662 = vunpack.c.l.b16 %v623
    %v663 = vunpack.c.l.b16 %v624
    %v664 = vunpack.c.l.b16 %v625
    %v665 = vunpack.c.l.b16 %v626
    %v666 = vunpack.c.l.b16 %v627
    %v667 = vunpack.c.l.b16 %v628
    %v668 = vunpack.c.l.b16 %v629
    %v669 = vunpack.c.l.b16 %v630
    %v670 = vunpack.c.l.b16 %v631
    %v671 = vunpack.c.l.b16 %v632
    %v672 = vunpack.c.l.b16 %v633
    %v673 = vunpack.c.l.b16 %v634
    %v674 = vunpack.c.l.b16 %v635
    %v675 = vunpack.c.l.b16 %v636
    %v676 = vunpack.c.l.b16 %v637
    %v677 = vpack.c.b16 %v662, %v661
    %v678 = vpack.c.b16 %v664, %v663
    %v679 = vpack.c.b16 %v666, %v665
    %v680 = vpack.c.b16 %v668, %v667
    %v681 = vpack.c.b16 %v670, %v669
    %v682 = vpack.c.b16 %v672, %v671
    %v683 = vpack.c.b16 %v674, %v673
    %v684 = vpack.c.b16 %v676, %v675
    %693 = vmatprep.subr.bf16.mxu0 0
    %694 = vmatpush1.bf16.msra.mxu0 %v677
    %695 = vmatprep.subr.bf16.mxu0 0
    %696 = vmatpush1.bf16.msra.mxu0 %v678
    %697 = vmatprep.subr.bf16.mxu0 0
    %698 = vmatpush1.bf16.msra.mxu0 %v679
    %699 = vmatprep.subr.bf16.mxu0 0
    %700 = vmatpush1.bf16.msra.mxu0 %v680
    %701 = vmatprep.subr.bf16.mxu0 0
    %702 = vmatpush1.bf16.msra.mxu0 %v681
    %703 = vmatprep.subr.bf16.mxu0 0
    %704 = vmatpush1.bf16.msra.mxu0 %v682
    %705 = vmatprep.subr.bf16.mxu0 0
    %706 = vmatpush1.bf16.msra.mxu0 %v683
    %707 = vmatprep.subr.bf16.mxu0 0
    %708 = vmatpush1.bf16.msra.mxu0 %v684
    %709 = vmatprep.subr.bf16.mxu0 0
    %710 = vmatpush1.bf16.msra.mxu0 0
    %711 = vmatprep.subr.bf16.mxu0 0
    %712 = vmatpush1.bf16.msra.mxu0 0
    %713 = vmatprep.subr.bf16.mxu0 0
    %714 = vmatpush1.bf16.msra.mxu0 0
    %715 = vmatprep.subr.bf16.mxu0 0
    %716 = vmatpush1.bf16.msra.mxu0 0
    %717 = vmatprep.subr.bf16.mxu0 0
    %718 = vmatpush1.bf16.msra.mxu0 0
    %719 = vmatprep.subr.bf16.mxu0 0
    %720 = vmatpush1.bf16.msra.mxu0 0
    %721 = vmatprep.subr.bf16.mxu0 0
    %722 = vmatpush1.bf16.msra.mxu0 0
    %723 = vmatprep.subr.bf16.mxu0 0
    %724 = vmatpush1.bf16.msra.mxu0 0
    %725 = vmatprep.mubr.bf16.mxu0 0
    %726 = vmatmul.mubr.bf16.gmra.mrb[0].mxu0 %v606
    %v727 = vpop.f32.mrb[0].mxu0
    %v728 = vadd.f32 %v643, %v727
    %v729 = vpop.f32.mrb[0].mxu0
    %v730 = vpop.f32.mrb[0].mxu0
    %v731 = vadd.f32 %v643, %v730
    %v732 = vpop.f32.mrb[0].mxu0
    %733 = vmatprep.mubr.bf16.mxu0 0
    %734 = vmatmul.mubr.bf16.gmra.mrb[0].mxu0 %v607
    %v735 = vpop.f32.mrb[0].mxu0
    %v736 = vadd.f32 %v643, %v735
    %v737 = vpop.f32.mrb[0].mxu0
    %v738 = vpop.f32.mrb[0].mxu0
    %v739 = vadd.f32 %v643, %v738
    %v740 = vpop.f32.mrb[0].mxu0
    %741 = vmatprep.mubr.bf16.mxu0 0
    %742 = vmatmul.mubr.bf16.gmra.mrb[0].mxu0 %v608
    %v743 = vpop.f32.mrb[0].mxu0
    %v744 = vadd.f32 %v643, %v743
    %v745 = vpop.f32.mrb[0].mxu0
    %v746 = vpop.f32.mrb[0].mxu0
    %v747 = vadd.f32 %v643, %v746
    %v748 = vpop.f32.mrb[0].mxu0
    %749 = vmatprep.mubr.bf16.mxu0 0
    %750 = vmatmul.mubr.bf16.gmra.mrb[0].mxu0 %v609
    %v751 = vpop.f32.mrb[0].mxu0
    %v752 = vadd.f32 %v643, %v751
    %v753 = vpop.f32.mrb[0].mxu0
    %v754 = vpop.f32.mrb[0].mxu0
    %v755 = vadd.f32 %v643, %v754
    %v756 = vpop.f32.mrb[0].mxu0
    %757 = vmatprep.mubr.bf16.mxu0 0
    %758 = vmatmul.mubr.bf16.gmra.mrb[0].mxu0 %v610
    %v759 = vpop.f32.mrb[0].mxu0
    %v760 = vadd.f32 %v643, %v759
    %v761 = vpop.f32.mrb[0].mxu0
    %v762 = vpop.f32.mrb[0].mxu0
    %v763 = vadd.f32 %v643, %v762
    %v764 = vpop.f32.mrb[0].mxu0
    %765 = vmatprep.mubr.bf16.mxu0 0
    %766 = vmatmul.mubr.bf16.gmra.mrb[0].mxu0 %v611
    %v767 = vpop.f32.mrb[0].mxu0
    %v768 = vadd.f32 %v643, %v767
    %v769 = vpop.f32.mrb[0].mxu0
    %v770 = vpop.f32.mrb[0].mxu0
    %v771 = vadd.f32 %v643, %v770
    %v772 = vpop.f32.mrb[0].mxu0
    %773 = vmatprep.mubr.bf16.mxu0 0
    %774 = vmatmul.mubr.bf16.gmra.mrb[0].mxu0 %v612
    %v775 = vpop.f32.mrb[0].mxu0
    %v776 = vadd.f32 %v643, %v775
    %v777 = vpop.f32.mrb[0].mxu0
    %v778 = vpop.f32.mrb[0].mxu0
    %v779 = vadd.f32 %v643, %v778
    %v780 = vpop.f32.mrb[0].mxu0
    %781 = vmatprep.mubr.bf16.mxu0 0
    %782 = vmatmul.mubr.bf16.gmra.mrb[0].mxu0 %v613
    %v783 = vpop.f32.mrb[0].mxu0
    %v784 = vadd.f32 %v643, %v783
    %v785 = vpop.f32.mrb[0].mxu0
    %v786 = vpop.f32.mrb[0].mxu0
    %v787 = vadd.f32 %v643, %v786
    %v788 = vpop.f32.mrb[0].mxu0
    %789 = vmatprep.mubr.bf16.mxu0 0
    %790 = vmatmul.mubr.bf16.gmra.mrb[0].mxu0 %v614
    %v791 = vpop.f32.mrb[0].mxu0
    %v792 = vadd.f32 %v643, %v791
    %v793 = vpop.f32.mrb[0].mxu0
    %v794 = vpop.f32.mrb[0].mxu0
    %v795 = vadd.f32 %v643, %v794
    %v796 = vpop.f32.mrb[0].mxu0
    %797 = vmatprep.mubr.bf16.mxu0 0
    %798 = vmatmul.mubr.bf16.gmra.mrb[0].mxu0 %v615
    %v799 = vpop.f32.mrb[0].mxu0
    %v800 = vadd.f32 %v643, %v799
    %v801 = vpop.f32.mrb[0].mxu0
    %v802 = vpop.f32.mrb[0].mxu0
    %v803 = vadd.f32 %v643, %v802
    %v804 = vpop.f32.mrb[0].mxu0
    %805 = vmatprep.mubr.bf16.mxu0 0
    %806 = vmatmul.mubr.bf16.gmra.mrb[0].mxu0 %v616
    %v807 = vpop.f32.mrb[0].mxu0
    %v808 = vadd.f32 %v643, %v807
    %v809 = vpop.f32.mrb[0].mxu0
    %v810 = vpop.f32.mrb[0].mxu0
    %v811 = vadd.f32 %v643, %v810
    %v812 = vpop.f32.mrb[0].mxu0
    %813 = vmatprep.mubr.bf16.mxu0 0
    %814 = vmatmul.mubr.bf16.gmra.mrb[0].mxu0 %v617
    %v815 = vpop.f32.mrb[0].mxu0
    %v816 = vadd.f32 %v643, %v815
    %v817 = vpop.f32.mrb[0].mxu0
    %v818 = vpop.f32.mrb[0].mxu0
    %v819 = vadd.f32 %v643, %v818
    %v820 = vpop.f32.mrb[0].mxu0
    %821 = vmatprep.mubr.bf16.mxu0 0
    %822 = vmatmul.mubr.bf16.gmra.mrb[0].mxu0 %v618
    %v823 = vpop.f32.mrb[0].mxu0
    %v824 = vadd.f32 %v643, %v823
    %v825 = vpop.f32.mrb[0].mxu0
    %v826 = vpop.f32.mrb[0].mxu0
    %v827 = vadd.f32 %v643, %v826
    %v828 = vpop.f32.mrb[0].mxu0
    %829 = vmatprep.mubr.bf16.mxu0 0
    %830 = vmatmul.mubr.bf16.gmra.mrb[0].mxu0 %v619
    %v831 = vpop.f32.mrb[0].mxu0
    %v832 = vadd.f32 %v643, %v831
    %v833 = vpop.f32.mrb[0].mxu0
    %v834 = vpop.f32.mrb[0].mxu0
    %v835 = vadd.f32 %v643, %v834
    %v836 = vpop.f32.mrb[0].mxu0
    %837 = vmatprep.mubr.bf16.mxu0 0
    %838 = vmatmul.mubr.bf16.gmra.mrb[0].mxu0 %v620
    %v839 = vpop.f32.mrb[0].mxu0
    %v840 = vadd.f32 %v643, %v839
    %v841 = vpop.f32.mrb[0].mxu0
    %v842 = vpop.f32.mrb[0].mxu0
    %v843 = vadd.f32 %v643, %v842
    %v844 = vpop.f32.mrb[0].mxu0
    %845 = vmatprep.mubr.bf16.mxu0 0
    %846 = vmatmul.mubr.bf16.gmra.mrb[0].mxu0 %v621
    %v847 = vpop.f32.mrb[0].mxu0
    %v848 = vadd.f32 %v643, %v847
    %v849 = vpop.f32.mrb[0].mxu0
    %v850 = vpop.f32.mrb[0].mxu0
    %v851 = vadd.f32 %v643, %v850
    %v852 = vpop.f32.mrb[0].mxu0
    %853 = vdwg.mxu0
    %v854 = vmax.f32 %v728, 0.0
    %v855 = vmax.f32 %v731, 0.0
    %v856 = vmax.f32 %v736, 0.0
    %v857 = vmax.f32 %v739, 0.0
    %v858 = vmax.f32 %v744, 0.0
    %v859 = vmax.f32 %v747, 0.0
    %v860 = vmax.f32 %v752, 0.0
    %v861 = vmax.f32 %v755, 0.0
    %v862 = vmax.f32 %v760, 0.0
    %v863 = vmax.f32 %v763, 0.0
    %v864 = vmax.f32 %v768, 0.0
    %v865 = vmax.f32 %v771, 0.0
    %v866 = vmax.f32 %v776, 0.0
    %v867 = vmax.f32 %v779, 0.0
    %v868 = vmax.f32 %v784, 0.0
    %v869 = vmax.f32 %v787, 0.0
    %v870 = vmax.f32 %v792, 0.0
    %v871 = vmax.f32 %v795, 0.0
    %v872 = vmax.f32 %v800, 0.0
    %v873 = vmax.f32 %v803, 0.0
    %v874 = vmax.f32 %v808, 0.0
    %v875 = vmax.f32 %v811, 0.0
    %v876 = vmax.f32 %v816, 0.0
    %v877 = vmax.f32 %v819, 0.0
    %v878 = vmax.f32 %v824, 0.0
    %v879 = vmax.f32 %v827, 0.0
    %v880 = vmax.f32 %v832, 0.0
    %v881 = vmax.f32 %v835, 0.0
    %v882 = vmax.f32 %v840, 0.0
    %v883 = vmax.f32 %v843, 0.0
    %v884 = vmax.f32 %v848, 0.0
    %v885 = vmax.f32 %v851, 0.0
    %v886 = vpack.c.bf16 %v855, %v854
    %v887 = vpack.c.bf16 %v857, %v856
    %v888 = vpack.c.bf16 %v859, %v858
    %v889 = vpack.c.bf16 %v861, %v860
    %v890 = vpack.c.bf16 %v863, %v862
    %v891 = vpack.c.bf16 %v865, %v864
    %v892 = vpack.c.bf16 %v867, %v866
    %v893 = vpack.c.bf16 %v869, %v868
    %v894 = vpack.c.bf16 %v871, %v870
    %v895 = vpack.c.bf16 %v873, %v872
    %v896 = vpack.c.bf16 %v875, %v874
    %v897 = vpack.c.bf16 %v877, %v876
    %v898 = vpack.c.bf16 %v879, %v878
    %v899 = vpack.c.bf16 %v881, %v880
    %v900 = vpack.c.bf16 %v883, %v882
    %v901 = vpack.c.bf16 %v885, %v884
    %902 = vmatprep.subr.bf16.mxu0 0
    %903 = vmatpush1.bf16.msra.mxu0 %v886
    %904 = vmatprep.subr.bf16.mxu0 0
    %905 = vmatpush1.bf16.msra.mxu0 %v887
    %906 = vmatprep.subr.bf16.mxu0 0
    %907 = vmatpush1.bf16.msra.mxu0 %v888
    %908 = vmatprep.subr.bf16.mxu0 0
    %909 = vmatpush1.bf16.msra.mxu0 %v889
    %910 = vmatprep.subr.bf16.mxu0 0
    %911 = vmatpush1.bf16.msra.mxu0 %v890
    %912 = vmatprep.subr.bf16.mxu0 0
    %913 = vmatpush1.bf16.msra.mxu0 %v891
    %914 = vmatprep.subr.bf16.mxu0 0
    %915 = vmatpush1.bf16.msra.mxu0 %v892
    %916 = vmatprep.subr.bf16.mxu0 0
    %917 = vmatpush1.bf16.msra.mxu0 %v893
    %918 = vmatprep.subr.bf16.mxu0 0
    %919 = vmatpush1.bf16.msra.mxu0 %v894
    %920 = vmatprep.subr.bf16.mxu0 0
    %921 = vmatpush1.bf16.msra.mxu0 %v895
    %922 = vmatprep.subr.bf16.mxu0 0
    %923 = vmatpush1.bf16.msra.mxu0 %v896
    %924 = vmatprep.subr.bf16.mxu0 0
    %925 = vmatpush1.bf16.msra.mxu0 %v897
    %926 = vmatprep.subr.bf16.mxu0 0
    %927 = vmatpush1.bf16.msra.mxu0 %v898
    %928 = vmatprep.subr.bf16.mxu0 0
    %929 = vmatpush1.bf16.msra.mxu0 %v899
    %930 = vmatprep.subr.bf16.mxu0 0
    %931 = vmatpush1.bf16.msra.mxu0 %v900
    %932 = vmatprep.subr.bf16.mxu0 0
    %933 = vmatpush1.bf16.msra.mxu0 %v901
    %934 = vmatprep.mubr.bf16.mxu0 %v286
    %935 = vmatmul.mubr.bf16.gmra.mrb[0].mxu0 %v285
    %v936 = vpop.f32.mrb[0].mxu0
    %v937 = vadd.f32 0.0, %v936
    %v938 = vpop.f32.mrb[0].mxu0
    %v939 = vpop.f32.mrb[0].mxu0
    %v940 = vadd.f32 0.0, %v939
    %v941 = vpop.f32.mrb[0].mxu0
    %942 = vmatprep.mubr.bf16.mxu0 %v288
    %943 = vmatmul.mubr.bf16.gmra.mrb[0].mxu0 %v287
    %v944 = vpop.f32.mrb[0].mxu0
    %v945 = vadd.f32 0.0, %v944
    %v946 = vpop.f32.mrb[0].mxu0
    %v947 = vpop.f32.mrb[0].mxu0
    %v948 = vadd.f32 0.0, %v947
    %v949 = vpop.f32.mrb[0].mxu0
    %950 = vmatprep.mubr.bf16.mxu0 %v290
    %951 = vmatmul.mubr.bf16.gmra.mrb[0].mxu0 %v289
    %v952 = vpop.f32.mrb[0].mxu0
    %v953 = vadd.f32 0.0, %v952
    %v954 = vpop.f32.mrb[0].mxu0
    %v955 = vpop.f32.mrb[0].mxu0
    %v956 = vadd.f32 0.0, %v955
    %v957 = vpop.f32.mrb[0].mxu0
    %958 = vmatprep.mubr.bf16.mxu0 %v292
    %959 = vmatmul.mubr.bf16.gmra.mrb[0].mxu0 %v291
    %v960 = vpop.f32.mrb[0].mxu0
    %v961 = vadd.f32 0.0, %v960
    %v962 = vpop.f32.mrb[0].mxu0
    %v963 = vpop.f32.mrb[0].mxu0
    %v964 = vadd.f32 0.0, %v963
    %v965 = vpop.f32.mrb[0].mxu0
    %966 = vmatprep.mubr.bf16.mxu0 %v294
    %967 = vmatmul.mubr.bf16.gmra.mrb[0].mxu0 %v293
    %v968 = vpop.f32.mrb[0].mxu0
    %v969 = vadd.f32 0.0, %v968
    %v970 = vpop.f32.mrb[0].mxu0
    %v971 = vpop.f32.mrb[0].mxu0
    %v972 = vadd.f32 0.0, %v971
    %v973 = vpop.f32.mrb[0].mxu0
    %974 = vmatprep.mubr.bf16.mxu0 %v296
    %975 = vmatmul.mubr.bf16.gmra.mrb[0].mxu0 %v295
    %v976 = vpop.f32.mrb[0].mxu0
    %v977 = vadd.f32 0.0, %v976
    %v978 = vpop.f32.mrb[0].mxu0
    %v979 = vpop.f32.mrb[0].mxu0
    %v980 = vadd.f32 0.0, %v979
    %v981 = vpop.f32.mrb[0].mxu0
    %982 = vmatprep.mubr.bf16.mxu0 %v298
    %983 = vmatmul.mubr.bf16.gmra.mrb[0].mxu0 %v297
    %v984 = vpop.f32.mrb[0].mxu0
    %v985 = vadd.f32 0.0, %v984
    %v986 = vpop.f32.mrb[0].mxu0
    %v987 = vpop.f32.mrb[0].mxu0
    %v988 = vadd.f32 0.0, %v987
    %v989 = vpop.f32.mrb[0].mxu0
    %990 = vmatprep.mubr.bf16.mxu0 %v300
    %991 = vmatmul.mubr.bf16.gmra.mrb[0].mxu0 %v299
    %v992 = vpop.f32.mrb[0].mxu0
    %v993 = vadd.f32 0.0, %v992
    %v994 = vpop.f32.mrb[0].mxu0
    %v995 = vpop.f32.mrb[0].mxu0
    %v996 = vadd.f32 0.0, %v995
    %v997 = vpop.f32.mrb[0].mxu0
    %998 = vmatprep.mubr.bf16.mxu0 %v302
    %999 = vmatmul.mubr.bf16.gmra.mrb[0].mxu0 %v301
    %v1000 = vpop.f32.mrb[0].mxu0
    %v1001 = vadd.f32 0.0, %v1000
    %v1002 = vpop.f32.mrb[0].mxu0
    %v1003 = vpop.f32.mrb[0].mxu0
    %v1004 = vadd.f32 0.0, %v1003
    %v1005 = vpop.f32.mrb[0].mxu0
    %1006 = vmatprep.mubr.bf16.mxu0 %v304
    %1007 = vmatmul.mubr.bf16.gmra.mrb[0].mxu0 %v303
    %v1008 = vpop.f32.mrb[0].mxu0
    %v1009 = vadd.f32 0.0, %v1008
    %v1010 = vpop.f32.mrb[0].mxu0
    %v1011 = vpop.f32.mrb[0].mxu0
    %v1012 = vadd.f32 0.0, %v1011
    %v1013 = vpop.f32.mrb[0].mxu0
    %1014 = vmatprep.mubr.bf16.mxu0 %v306
    %1015 = vmatmul.mubr.bf16.gmra.mrb[0].mxu0 %v305
    %v1016 = vpop.f32.mrb[0].mxu0
    %v1017 = vadd.f32 0.0, %v1016
    %v1018 = vpop.f32.mrb[0].mxu0
    %v1019 = vpop.f32.mrb[0].mxu0
    %v1020 = vadd.f32 0.0, %v1019
    %v1021 = vpop.f32.mrb[0].mxu0
    %1022 = vmatprep.mubr.bf16.mxu0 %v308
    %1023 = vmatmul.mubr.bf16.gmra.mrb[0].mxu0 %v307
    %v1024 = vpop.f32.mrb[0].mxu0
    %v1025 = vadd.f32 0.0, %v1024
    %v1026 = vpop.f32.mrb[0].mxu0
    %v1027 = vpop.f32.mrb[0].mxu0
    %v1028 = vadd.f32 0.0, %v1027
    %v1029 = vpop.f32.mrb[0].mxu0
    %1030 = vmatprep.mubr.bf16.mxu0 %v310
    %1031 = vmatmul.mubr.bf16.gmra.mrb[0].mxu0 %v309
    %v1032 = vpop.f32.mrb[0].mxu0
    %v1033 = vadd.f32 0.0, %v1032
    %v1034 = vpop.f32.mrb[0].mxu0
    %v1035 = vpop.f32.mrb[0].mxu0
    %v1036 = vadd.f32 0.0, %v1035
    %v1037 = vpop.f32.mrb[0].mxu0
    %1038 = vmatprep.mubr.bf16.mxu0 %v312
    %1039 = vmatmul.mubr.bf16.gmra.mrb[0].mxu0 %v311
    %v1040 = vpop.f32.mrb[0].mxu0
    %v1041 = vadd.f32 0.0, %v1040
    %v1042 = vpop.f32.mrb[0].mxu0
    %v1043 = vpop.f32.mrb[0].mxu0
    %v1044 = vadd.f32 0.0, %v1043
    %v1045 = vpop.f32.mrb[0].mxu0
    %1046 = vmatprep.mubr.bf16.mxu0 %v314
    %1047 = vmatmul.mubr.bf16.gmra.mrb[0].mxu0 %v313
    %v1048 = vpop.f32.mrb[0].mxu0
    %v1049 = vadd.f32 0.0, %v1048
    %v1050 = vpop.f32.mrb[0].mxu0
    %v1051 = vpop.f32.mrb[0].mxu0
    %v1052 = vadd.f32 0.0, %v1051
    %v1053 = vpop.f32.mrb[0].mxu0
    %1054 = vmatprep.mubr.bf16.mxu0 %v316
    %1055 = vmatmul.mubr.bf16.gmra.mrb[0].mxu0 %v315
    %v1056 = vpop.f32.mrb[0].mxu0
    %v1057 = vadd.f32 0.0, %v1056
    %v1058 = vpop.f32.mrb[0].mxu0
    %v1059 = vpop.f32.mrb[0].mxu0
    %v1060 = vadd.f32 0.0, %v1059
    %v1061 = vpop.f32.mrb[0].mxu0
    %1062 = vdwg.mxu0
    %v1063 = vpack.c.bf16 %v940, %v937
    %v1064 = vpack.c.bf16 %v948, %v945
    %v1065 = vpack.c.bf16 %v956, %v953
    %v1066 = vpack.c.bf16 %v964, %v961
    %v1067 = vpack.c.bf16 %v972, %v969
    %v1068 = vpack.c.bf16 %v980, %v977
    %v1069 = vpack.c.bf16 %v988, %v985
    %v1070 = vpack.c.bf16 %v996, %v993
    %v1071 = vpack.c.bf16 %v1004, %v1001
    %v1072 = vpack.c.bf16 %v1012, %v1009
    %v1073 = vpack.c.bf16 %v1020, %v1017
    %v1074 = vpack.c.bf16 %v1028, %v1025
    %v1075 = vpack.c.bf16 %v1036, %v1033
    %v1076 = vpack.c.bf16 %v1044, %v1041
    %v1077 = vpack.c.bf16 %v1052, %v1049
    %v1078 = vpack.c.bf16 %v1060, %v1057
    %s1079 = scalar_lea.vmem [#allocation7], 64
    %v1080 = vld [vmem:[%s1079] sm:$0xf]
    %v1081 = vld [vmem:[%s1079 + $0x4] sm:$0xf]
    %v1082 = vld [vmem:[%s1079 + $0x8] sm:$0xf]
    %v1083 = vld [vmem:[%s1079 + $0xc] sm:$0xf]
    %v1084 = vld [vmem:[%s1079 + $0x10] sm:$0xf]
    %v1085 = vld [vmem:[%s1079 + $0x14] sm:$0xf]
    %v1086 = vld [vmem:[%s1079 + $0x18] sm:$0xf]
    %v1087 = vld [vmem:[%s1079 + $0x1c] sm:$0xf]
    %v1088 = vld [vmem:[%s1079 + $0x20] sm:$0xf]
    %v1089 = vld [vmem:[%s1079 + $0x24] sm:$0xf]
    %v1090 = vld [vmem:[%s1079 + $0x28] sm:$0xf]
    %v1091 = vld [vmem:[%s1079 + $0x2c] sm:$0xf]
    %v1092 = vld [vmem:[%s1079 + $0x30] sm:$0xf]
    %v1093 = vld [vmem:[%s1079 + $0x34] sm:$0xf]
    %v1094 = vld [vmem:[%s1079 + $0x38] sm:$0xf]
    %v1095 = vld [vmem:[%s1079 + $0x3c] sm:$0xf]
    %s1096 = scalar_lea.vmem %s4, 1
    %v1097 = vld [vmem:[%s1096] sm:$0x1]
    %v1099 = vlaneseq
    %v1100 = vshrl.u32 %v1099, 7
    %v1101 = vsub.s32 0, %v1100
    %v1102 = vrot.slane %v1097, %v1101
    %v1120 = vunpack.c.l.b16 %v1080
    %v1121 = vunpack.c.l.b16 %v1081
    %v1122 = vunpack.c.l.b16 %v1082
    %v1123 = vunpack.c.l.b16 %v1083
    %v1124 = vunpack.c.l.b16 %v1084
    %v1125 = vunpack.c.l.b16 %v1085
    %v1126 = vunpack.c.l.b16 %v1086
    %v1127 = vunpack.c.l.b16 %v1087
    %v1128 = vunpack.c.l.b16 %v1088
    %v1129 = vunpack.c.l.b16 %v1089
    %v1130 = vunpack.c.l.b16 %v1090
    %v1131 = vunpack.c.l.b16 %v1091
    %v1132 = vunpack.c.l.b16 %v1092
    %v1133 = vunpack.c.l.b16 %v1093
    %v1134 = vunpack.c.l.b16 %v1094
    %v1135 = vunpack.c.l.b16 %v1095
    %v1136 = vpack.c.b16 %v1121, %v1120
    %v1137 = vpack.c.b16 %v1123, %v1122
    %v1138 = vpack.c.b16 %v1125, %v1124
    %v1139 = vpack.c.b16 %v1127, %v1126
    %v1140 = vpack.c.b16 %v1129, %v1128
    %v1141 = vpack.c.b16 %v1131, %v1130
    %v1142 = vpack.c.b16 %v1133, %v1132
    %v1143 = vpack.c.b16 %v1135, %v1134
    %1152 = vmatprep.subr.bf16.mxu0 0
    %1153 = vmatpush1.bf16.msra.mxu0 %v1136
    %1154 = vmatprep.subr.bf16.mxu0 0
    %1155 = vmatpush1.bf16.msra.mxu0 %v1137
    %1156 = vmatprep.subr.bf16.mxu0 0
    %1157 = vmatpush1.bf16.msra.mxu0 %v1138
    %1158 = vmatprep.subr.bf16.mxu0 0
    %1159 = vmatpush1.bf16.msra.mxu0 %v1139
    %1160 = vmatprep.subr.bf16.mxu0 0
    %1161 = vmatpush1.bf16.msra.mxu0 %v1140
    %1162 = vmatprep.subr.bf16.mxu0 0
    %1163 = vmatpush1.bf16.msra.mxu0 %v1141
    %1164 = vmatprep.subr.bf16.mxu0 0
    %1165 = vmatpush1.bf16.msra.mxu0 %v1142
    %1166 = vmatprep.subr.bf16.mxu0 0
    %1167 = vmatpush1.bf16.msra.mxu0 %v1143
    %1168 = vmatprep.subr.bf16.mxu0 0
    %1169 = vmatpush1.bf16.msra.mxu0 0
    %1170 = vmatprep.subr.bf16.mxu0 0
    %1171 = vmatpush1.bf16.msra.mxu0 0
    %1172 = vmatprep.subr.bf16.mxu0 0
    %1173 = vmatpush1.bf16.msra.mxu0 0
    %1174 = vmatprep.subr.bf16.mxu0 0
    %1175 = vmatpush1.bf16.msra.mxu0 0
    %1176 = vmatprep.subr.bf16.mxu0 0
    %1177 = vmatpush1.bf16.msra.mxu0 0
    %1178 = vmatprep.subr.bf16.mxu0 0
    %1179 = vmatpush1.bf16.msra.mxu0 0
    %1180 = vmatprep.subr.bf16.mxu0 0
    %1181 = vmatpush1.bf16.msra.mxu0 0
    %1182 = vmatprep.subr.bf16.mxu0 0
    %1183 = vmatpush1.bf16.msra.mxu0 0
    %1184 = vmatprep.mubr.bf16.mxu0 0
    %1185 = vmatmul.mubr.bf16.gmra.mrb[0].mxu0 %v1063
    %v1186 = vpop.f32.mrb[0].mxu0
    %v1187 = vadd.f32 %v1102, %v1186
    %v1188 = vpop.f32.mrb[0].mxu0
    %v1189 = vpop.f32.mrb[0].mxu0
    %v1190 = vadd.f32 %v1102, %v1189
    %v1191 = vpop.f32.mrb[0].mxu0
    %1192 = vmatprep.mubr.bf16.mxu0 0
    %1193 = vmatmul.mubr.bf16.gmra.mrb[0].mxu0 %v1064
    %v1194 = vpop.f32.mrb[0].mxu0
    %v1195 = vadd.f32 %v1102, %v1194
    %v1196 = vpop.f32.mrb[0].mxu0
    %v1197 = vpop.f32.mrb[0].mxu0
    %v1198 = vadd.f32 %v1102, %v1197
    %v1199 = vpop.f32.mrb[0].mxu0
    %1200 = vmatprep.mubr.bf16.mxu0 0
    %1201 = vmatmul.mubr.bf16.gmra.mrb[0].mxu0 %v1065
    %v1202 = vpop.f32.mrb[0].mxu0
    %v1203 = vadd.f32 %v1102, %v1202
    %v1204 = vpop.f32.mrb[0].mxu0
    %v1205 = vpop.f32.mrb[0].mxu0
    %v1206 = vadd.f32 %v1102, %v1205
    %v1207 = vpop.f32.mrb[0].mxu0
    %1208 = vmatprep.mubr.bf16.mxu0 0
    %1209 = vmatmul.mubr.bf16.gmra.mrb[0].mxu0 %v1066
    %v1210 = vpop.f32.mrb[0].mxu0
    %v1211 = vadd.f32 %v1102, %v1210
    %v1212 = vpop.f32.mrb[0].mxu0
    %v1213 = vpop.f32.mrb[0].mxu0
    %v1214 = vadd.f32 %v1102, %v1213
    %v1215 = vpop.f32.mrb[0].mxu0
    %1216 = vmatprep.mubr.bf16.mxu0 0
    %1217 = vmatmul.mubr.bf16.gmra.mrb[0].mxu0 %v1067
    %v1218 = vpop.f32.mrb[0].mxu0
    %v1219 = vadd.f32 %v1102, %v1218
    %v1220 = vpop.f32.mrb[0].mxu0
    %v1221 = vpop.f32.mrb[0].mxu0
    %v1222 = vadd.f32 %v1102, %v1221
    %v1223 = vpop.f32.mrb[0].mxu0
    %1224 = vmatprep.mubr.bf16.mxu0 0
    %1225 = vmatmul.mubr.bf16.gmra.mrb[0].mxu0 %v1068
    %v1226 = vpop.f32.mrb[0].mxu0
    %v1227 = vadd.f32 %v1102, %v1226
    %v1228 = vpop.f32.mrb[0].mxu0
    %v1229 = vpop.f32.mrb[0].mxu0
    %v1230 = vadd.f32 %v1102, %v1229
    %v1231 = vpop.f32.mrb[0].mxu0
    %1232 = vmatprep.mubr.bf16.mxu0 0
    %1233 = vmatmul.mubr.bf16.gmra.mrb[0].mxu0 %v1069
    %v1234 = vpop.f32.mrb[0].mxu0
    %v1235 = vadd.f32 %v1102, %v1234
    %v1236 = vpop.f32.mrb[0].mxu0
    %v1237 = vpop.f32.mrb[0].mxu0
    %v1238 = vadd.f32 %v1102, %v1237
    %v1239 = vpop.f32.mrb[0].mxu0
    %1240 = vmatprep.mubr.bf16.mxu0 0
    %1241 = vmatmul.mubr.bf16.gmra.mrb[0].mxu0 %v1070
    %v1242 = vpop.f32.mrb[0].mxu0
    %v1243 = vadd.f32 %v1102, %v1242
    %v1244 = vpop.f32.mrb[0].mxu0
    %v1245 = vpop.f32.mrb[0].mxu0
    %v1246 = vadd.f32 %v1102, %v1245
    %v1247 = vpop.f32.mrb[0].mxu0
    %1248 = vmatprep.mubr.bf16.mxu0 0
    %1249 = vmatmul.mubr.bf16.gmra.mrb[0].mxu0 %v1071
    %v1250 = vpop.f32.mrb[0].mxu0
    %v1251 = vadd.f32 %v1102, %v1250
    %v1252 = vpop.f32.mrb[0].mxu0
    %v1253 = vpop.f32.mrb[0].mxu0
    %v1254 = vadd.f32 %v1102, %v1253
    %v1255 = vpop.f32.mrb[0].mxu0
    %1256 = vmatprep.mubr.bf16.mxu0 0
    %1257 = vmatmul.mubr.bf16.gmra.mrb[0].mxu0 %v1072
    %v1258 = vpop.f32.mrb[0].mxu0
    %v1259 = vadd.f32 %v1102, %v1258
    %v1260 = vpop.f32.mrb[0].mxu0
    %v1261 = vpop.f32.mrb[0].mxu0
    %v1262 = vadd.f32 %v1102, %v1261
    %v1263 = vpop.f32.mrb[0].mxu0
    %1264 = vmatprep.mubr.bf16.mxu0 0
    %1265 = vmatmul.mubr.bf16.gmra.mrb[0].mxu0 %v1073
    %v1266 = vpop.f32.mrb[0].mxu0
    %v1267 = vadd.f32 %v1102, %v1266
    %v1268 = vpop.f32.mrb[0].mxu0
    %v1269 = vpop.f32.mrb[0].mxu0
    %v1270 = vadd.f32 %v1102, %v1269
    %v1271 = vpop.f32.mrb[0].mxu0
    %1272 = vmatprep.mubr.bf16.mxu0 0
    %1273 = vmatmul.mubr.bf16.gmra.mrb[0].mxu0 %v1074
    %v1274 = vpop.f32.mrb[0].mxu0
    %v1275 = vadd.f32 %v1102, %v1274
    %v1276 = vpop.f32.mrb[0].mxu0
    %v1277 = vpop.f32.mrb[0].mxu0
    %v1278 = vadd.f32 %v1102, %v1277
    %v1279 = vpop.f32.mrb[0].mxu0
    %1280 = vmatprep.mubr.bf16.mxu0 0
    %1281 = vmatmul.mubr.bf16.gmra.mrb[0].mxu0 %v1075
    %v1282 = vpop.f32.mrb[0].mxu0
    %v1283 = vadd.f32 %v1102, %v1282
    %v1284 = vpop.f32.mrb[0].mxu0
    %v1285 = vpop.f32.mrb[0].mxu0
    %v1286 = vadd.f32 %v1102, %v1285
    %v1287 = vpop.f32.mrb[0].mxu0
    %1288 = vmatprep.mubr.bf16.mxu0 0
    %1289 = vmatmul.mubr.bf16.gmra.mrb[0].mxu0 %v1076
    %v1290 = vpop.f32.mrb[0].mxu0
    %v1291 = vadd.f32 %v1102, %v1290
    %v1292 = vpop.f32.mrb[0].mxu0
    %v1293 = vpop.f32.mrb[0].mxu0
    %v1294 = vadd.f32 %v1102, %v1293
    %v1295 = vpop.f32.mrb[0].mxu0
    %1296 = vmatprep.mubr.bf16.mxu0 0
    %1297 = vmatmul.mubr.bf16.gmra.mrb[0].mxu0 %v1077
    %v1298 = vpop.f32.mrb[0].mxu0
    %v1299 = vadd.f32 %v1102, %v1298
    %v1300 = vpop.f32.mrb[0].mxu0
    %v1301 = vpop.f32.mrb[0].mxu0
    %v1302 = vadd.f32 %v1102, %v1301
    %v1303 = vpop.f32.mrb[0].mxu0
    %1304 = vmatprep.mubr.bf16.mxu0 0
    %1305 = vmatmul.mubr.bf16.gmra.mrb[0].mxu0 %v1078
    %v1306 = vpop.f32.mrb[0].mxu0
    %v1307 = vadd.f32 %v1102, %v1306
    %v1308 = vpop.f32.mrb[0].mxu0
    %v1309 = vpop.f32.mrb[0].mxu0
    %v1310 = vadd.f32 %v1102, %v1309
    %v1311 = vpop.f32.mrb[0].mxu0
    %1312 = vdwg.mxu0
    %v1313 = vmax.f32 %v1187, 0.0
    %v1314 = vmax.f32 %v1190, 0.0
    %v1315 = vmax.f32 %v1195, 0.0
    %v1316 = vmax.f32 %v1198, 0.0
    %v1317 = vmax.f32 %v1203, 0.0
    %v1318 = vmax.f32 %v1206, 0.0
    %v1319 = vmax.f32 %v1211, 0.0
    %v1320 = vmax.f32 %v1214, 0.0
    %v1321 = vmax.f32 %v1219, 0.0
    %v1322 = vmax.f32 %v1222, 0.0
    %v1323 = vmax.f32 %v1227, 0.0
    %v1324 = vmax.f32 %v1230, 0.0
    %v1325 = vmax.f32 %v1235, 0.0
    %v1326 = vmax.f32 %v1238, 0.0
    %v1327 = vmax.f32 %v1243, 0.0
    %v1328 = vmax.f32 %v1246, 0.0
    %v1329 = vmax.f32 %v1251, 0.0
    %v1330 = vmax.f32 %v1254, 0.0
    %v1331 = vmax.f32 %v1259, 0.0
    %v1332 = vmax.f32 %v1262, 0.0
    %v1333 = vmax.f32 %v1267, 0.0
    %v1334 = vmax.f32 %v1270, 0.0
    %v1335 = vmax.f32 %v1275, 0.0
    %v1336 = vmax.f32 %v1278, 0.0
    %v1337 = vmax.f32 %v1283, 0.0
    %v1338 = vmax.f32 %v1286, 0.0
    %v1339 = vmax.f32 %v1291, 0.0
    %v1340 = vmax.f32 %v1294, 0.0
    %v1341 = vmax.f32 %v1299, 0.0
    %v1342 = vmax.f32 %v1302, 0.0
    %v1343 = vmax.f32 %v1307, 0.0
    %v1344 = vmax.f32 %v1310, 0.0
    %v1345 = vpack.c.bf16 %v1314, %v1313
    %v1346 = vpack.c.bf16 %v1316, %v1315
    %v1347 = vpack.c.bf16 %v1318, %v1317
    %v1348 = vpack.c.bf16 %v1320, %v1319
    %v1349 = vpack.c.bf16 %v1322, %v1321
    %v1350 = vpack.c.bf16 %v1324, %v1323
    %v1351 = vpack.c.bf16 %v1326, %v1325
    %v1352 = vpack.c.bf16 %v1328, %v1327
    %v1353 = vpack.c.bf16 %v1330, %v1329
    %v1354 = vpack.c.bf16 %v1332, %v1331
    %v1355 = vpack.c.bf16 %v1334, %v1333
    %v1356 = vpack.c.bf16 %v1336, %v1335
    %v1357 = vpack.c.bf16 %v1338, %v1337
    %v1358 = vpack.c.bf16 %v1340, %v1339
    %v1359 = vpack.c.bf16 %v1342, %v1341
    %v1360 = vpack.c.bf16 %v1344, %v1343
    %1361 = vmatprep.subr.bf16.mxu0 0
    %1362 = vmatpush1.bf16.msra.mxu0 %v1345
    %1363 = vmatprep.subr.bf16.mxu0 0
    %1364 = vmatpush1.bf16.msra.mxu0 %v1346
    %1365 = vmatprep.subr.bf16.mxu0 0
    %1366 = vmatpush1.bf16.msra.mxu0 %v1347
    %1367 = vmatprep.subr.bf16.mxu0 0
    %1368 = vmatpush1.bf16.msra.mxu0 %v1348
    %1369 = vmatprep.subr.bf16.mxu0 0
    %1370 = vmatpush1.bf16.msra.mxu0 %v1349
    %1371 = vmatprep.subr.bf16.mxu0 0
    %1372 = vmatpush1.bf16.msra.mxu0 %v1350
    %1373 = vmatprep.subr.bf16.mxu0 0
    %1374 = vmatpush1.bf16.msra.mxu0 %v1351
    %1375 = vmatprep.subr.bf16.mxu0 0
    %1376 = vmatpush1.bf16.msra.mxu0 %v1352
    %1377 = vmatprep.subr.bf16.mxu0 0
    %1378 = vmatpush1.bf16.msra.mxu0 %v1353
    %1379 = vmatprep.subr.bf16.mxu0 0
    %1380 = vmatpush1.bf16.msra.mxu0 %v1354
    %1381 = vmatprep.subr.bf16.mxu0 0
    %1382 = vmatpush1.bf16.msra.mxu0 %v1355
    %1383 = vmatprep.subr.bf16.mxu0 0
    %1384 = vmatpush1.bf16.msra.mxu0 %v1356
    %1385 = vmatprep.subr.bf16.mxu0 0
    %1386 = vmatpush1.bf16.msra.mxu0 %v1357
    %1387 = vmatprep.subr.bf16.mxu0 0
    %1388 = vmatpush1.bf16.msra.mxu0 %v1358
    %1389 = vmatprep.subr.bf16.mxu0 0
    %1390 = vmatpush1.bf16.msra.mxu0 %v1359
    %1391 = vmatprep.subr.bf16.mxu0 0
    %1392 = vmatpush1.bf16.msra.mxu0 %v1360
    %1393 = vmatprep.mubr.bf16.mxu0 %v286
    %1394 = vmatmul.mubr.bf16.gmra.mrb[0].mxu0 %v285
    %v1395 = vpop.f32.mrb[0].mxu0
    %v1396 = vadd.f32 0.0, %v1395
    %v1397 = vpop.f32.mrb[0].mxu0
    %v1398 = vpop.f32.mrb[0].mxu0
    %v1399 = vadd.f32 0.0, %v1398
    %v1400 = vpop.f32.mrb[0].mxu0
    %1401 = vmatprep.mubr.bf16.mxu0 %v288
    %1402 = vmatmul.mubr.bf16.gmra.mrb[0].mxu0 %v287
    %v1403 = vpop.f32.mrb[0].mxu0
    %v1404 = vadd.f32 0.0, %v1403
    %v1405 = vpop.f32.mrb[0].mxu0
    %v1406 = vpop.f32.mrb[0].mxu0
    %v1407 = vadd.f32 0.0, %v1406
    %v1408 = vpop.f32.mrb[0].mxu0
    %1409 = vmatprep.mubr.bf16.mxu0 %v290
    %1410 = vmatmul.mubr.bf16.gmra.mrb[0].mxu0 %v289
    %v1411 = vpop.f32.mrb[0].mxu0
    %v1412 = vadd.f32 0.0, %v1411
    %v1413 = vpop.f32.mrb[0].mxu0
    %v1414 = vpop.f32.mrb[0].mxu0
    %v1415 = vadd.f32 0.0, %v1414
    %v1416 = vpop.f32.mrb[0].mxu0
    %1417 = vmatprep.mubr.bf16.mxu0 %v292
    %1418 = vmatmul.mubr.bf16.gmra.mrb[0].mxu0 %v291
    %v1419 = vpop.f32.mrb[0].mxu0
    %v1420 = vadd.f32 0.0, %v1419
    %v1421 = vpop.f32.mrb[0].mxu0
    %v1422 = vpop.f32.mrb[0].mxu0
    %v1423 = vadd.f32 0.0, %v1422
    %v1424 = vpop.f32.mrb[0].mxu0
    %1425 = vmatprep.mubr.bf16.mxu0 %v294
    %1426 = vmatmul.mubr.bf16.gmra.mrb[0].mxu0 %v293
    %v1427 = vpop.f32.mrb[0].mxu0
    %v1428 = vadd.f32 0.0, %v1427
    %v1429 = vpop.f32.mrb[0].mxu0
    %v1430 = vpop.f32.mrb[0].mxu0
    %v1431 = vadd.f32 0.0, %v1430
    %v1432 = vpop.f32.mrb[0].mxu0
    %1433 = vmatprep.mubr.bf16.mxu0 %v296
    %1434 = vmatmul.mubr.bf16.gmra.mrb[0].mxu0 %v295
    %v1435 = vpop.f32.mrb[0].mxu0
    %v1436 = vadd.f32 0.0, %v1435
    %v1437 = vpop.f32.mrb[0].mxu0
    %v1438 = vpop.f32.mrb[0].mxu0
    %v1439 = vadd.f32 0.0, %v1438
    %v1440 = vpop.f32.mrb[0].mxu0
    %1441 = vmatprep.mubr.bf16.mxu0 %v298
    %1442 = vmatmul.mubr.bf16.gmra.mrb[0].mxu0 %v297
    %v1443 = vpop.f32.mrb[0].mxu0
    %v1444 = vadd.f32 0.0, %v1443
    %v1445 = vpop.f32.mrb[0].mxu0
    %v1446 = vpop.f32.mrb[0].mxu0
    %v1447 = vadd.f32 0.0, %v1446
    %v1448 = vpop.f32.mrb[0].mxu0
    %1449 = vmatprep.mubr.bf16.mxu0 %v300
    %1450 = vmatmul.mubr.bf16.gmra.mrb[0].mxu0 %v299
    %v1451 = vpop.f32.mrb[0].mxu0
    %v1452 = vadd.f32 0.0, %v1451
    %v1453 = vpop.f32.mrb[0].mxu0
    %v1454 = vpop.f32.mrb[0].mxu0
    %v1455 = vadd.f32 0.0, %v1454
    %v1456 = vpop.f32.mrb[0].mxu0
    %1457 = vmatprep.mubr.bf16.mxu0 %v302
    %1458 = vmatmul.mubr.bf16.gmra.mrb[0].mxu0 %v301
    %v1459 = vpop.f32.mrb[0].mxu0
    %v1460 = vadd.f32 0.0, %v1459
    %v1461 = vpop.f32.mrb[0].mxu0
    %v1462 = vpop.f32.mrb[0].mxu0
    %v1463 = vadd.f32 0.0, %v1462
    %v1464 = vpop.f32.mrb[0].mxu0
    %1465 = vmatprep.mubr.bf16.mxu0 %v304
    %1466 = vmatmul.mubr.bf16.gmra.mrb[0].mxu0 %v303
    %v1467 = vpop.f32.mrb[0].mxu0
    %v1468 = vadd.f32 0.0, %v1467
    %v1469 = vpop.f32.mrb[0].mxu0
    %v1470 = vpop.f32.mrb[0].mxu0
    %v1471 = vadd.f32 0.0, %v1470
    %v1472 = vpop.f32.mrb[0].mxu0
    %1473 = vmatprep.mubr.bf16.mxu0 %v306
    %1474 = vmatmul.mubr.bf16.gmra.mrb[0].mxu0 %v305
    %v1475 = vpop.f32.mrb[0].mxu0
    %v1476 = vadd.f32 0.0, %v1475
    %v1477 = vpop.f32.mrb[0].mxu0
    %v1478 = vpop.f32.mrb[0].mxu0
    %v1479 = vadd.f32 0.0, %v1478
    %v1480 = vpop.f32.mrb[0].mxu0
    %1481 = vmatprep.mubr.bf16.mxu0 %v308
    %1482 = vmatmul.mubr.bf16.gmra.mrb[0].mxu0 %v307
    %v1483 = vpop.f32.mrb[0].mxu0
    %v1484 = vadd.f32 0.0, %v1483
    %v1485 = vpop.f32.mrb[0].mxu0
    %v1486 = vpop.f32.mrb[0].mxu0
    %v1487 = vadd.f32 0.0, %v1486
    %v1488 = vpop.f32.mrb[0].mxu0
    %1489 = vmatprep.mubr.bf16.mxu0 %v310
    %1490 = vmatmul.mubr.bf16.gmra.mrb[0].mxu0 %v309
    %v1491 = vpop.f32.mrb[0].mxu0
    %v1492 = vadd.f32 0.0, %v1491
    %v1493 = vpop.f32.mrb[0].mxu0
    %v1494 = vpop.f32.mrb[0].mxu0
    %v1495 = vadd.f32 0.0, %v1494
    %v1496 = vpop.f32.mrb[0].mxu0
    %1497 = vmatprep.mubr.bf16.mxu0 %v312
    %1498 = vmatmul.mubr.bf16.gmra.mrb[0].mxu0 %v311
    %v1499 = vpop.f32.mrb[0].mxu0
    %v1500 = vadd.f32 0.0, %v1499
    %v1501 = vpop.f32.mrb[0].mxu0
    %v1502 = vpop.f32.mrb[0].mxu0
    %v1503 = vadd.f32 0.0, %v1502
    %v1504 = vpop.f32.mrb[0].mxu0
    %1505 = vmatprep.mubr.bf16.mxu0 %v314
    %1506 = vmatmul.mubr.bf16.gmra.mrb[0].mxu0 %v313
    %v1507 = vpop.f32.mrb[0].mxu0
    %v1508 = vadd.f32 0.0, %v1507
    %v1509 = vpop.f32.mrb[0].mxu0
    %v1510 = vpop.f32.mrb[0].mxu0
    %v1511 = vadd.f32 0.0, %v1510
    %v1512 = vpop.f32.mrb[0].mxu0
    %1513 = vmatprep.mubr.bf16.mxu0 %v316
    %1514 = vmatmul.mubr.bf16.gmra.mrb[0].mxu0 %v315
    %v1515 = vpop.f32.mrb[0].mxu0
    %v1516 = vadd.f32 0.0, %v1515
    %v1517 = vpop.f32.mrb[0].mxu0
    %v1518 = vpop.f32.mrb[0].mxu0
    %v1519 = vadd.f32 0.0, %v1518
    %v1520 = vpop.f32.mrb[0].mxu0
    %1521 = vdwg.mxu0
    %v1522 = vpack.c.bf16 %v1399, %v1396
    %v1523 = vpack.c.bf16 %v1407, %v1404
    %v1524 = vpack.c.bf16 %v1415, %v1412
    %v1525 = vpack.c.bf16 %v1423, %v1420
    %v1526 = vpack.c.bf16 %v1431, %v1428
    %v1527 = vpack.c.bf16 %v1439, %v1436
    %v1528 = vpack.c.bf16 %v1447, %v1444
    %v1529 = vpack.c.bf16 %v1455, %v1452
    %v1530 = vpack.c.bf16 %v1463, %v1460
    %v1531 = vpack.c.bf16 %v1471, %v1468
    %v1532 = vpack.c.bf16 %v1479, %v1476
    %v1533 = vpack.c.bf16 %v1487, %v1484
    %v1534 = vpack.c.bf16 %v1495, %v1492
    %v1535 = vpack.c.bf16 %v1503, %v1500
    %v1536 = vpack.c.bf16 %v1511, %v1508
    %v1537 = vpack.c.bf16 %v1519, %v1516
    %s1538 = scalar_lea.vmem [#allocation7], 128
    %v1539 = vld [vmem:[%s1538] sm:$0xf]
    %v1540 = vld [vmem:[%s1538 + $0x4] sm:$0xf]
    %v1541 = vld [vmem:[%s1538 + $0x8] sm:$0xf]
    %v1542 = vld [vmem:[%s1538 + $0xc] sm:$0xf]
    %v1543 = vld [vmem:[%s1538 + $0x10] sm:$0xf]
    %v1544 = vld [vmem:[%s1538 + $0x14] sm:$0xf]
    %v1545 = vld [vmem:[%s1538 + $0x18] sm:$0xf]
    %v1546 = vld [vmem:[%s1538 + $0x1c] sm:$0xf]
    %v1547 = vld [vmem:[%s1538 + $0x20] sm:$0xf]
    %v1548 = vld [vmem:[%s1538 + $0x24] sm:$0xf]
    %v1549 = vld [vmem:[%s1538 + $0x28] sm:$0xf]
    %v1550 = vld [vmem:[%s1538 + $0x2c] sm:$0xf]
    %v1551 = vld [vmem:[%s1538 + $0x30] sm:$0xf]
    %v1552 = vld [vmem:[%s1538 + $0x34] sm:$0xf]
    %v1553 = vld [vmem:[%s1538 + $0x38] sm:$0xf]
    %v1554 = vld [vmem:[%s1538 + $0x3c] sm:$0xf]
    %s1555 = scalar_lea.vmem %s4, 2
    %v1556 = vld [vmem:[%s1555] sm:$0x1]
    %v1558 = vlaneseq
    %v1559 = vshrl.u32 %v1558, 7
    %v1560 = vsub.s32 0, %v1559
    %v1561 = vrot.slane %v1556, %v1560
    %v1579 = vunpack.c.l.b16 %v1539
    %v1580 = vunpack.c.l.b16 %v1540
    %v1581 = vunpack.c.l.b16 %v1541
    %v1582 = vunpack.c.l.b16 %v1542
    %v1583 = vunpack.c.l.b16 %v1543
    %v1584 = vunpack.c.l.b16 %v1544
    %v1585 = vunpack.c.l.b16 %v1545
    %v1586 = vunpack.c.l.b16 %v1546
    %v1587 = vunpack.c.l.b16 %v1547
    %v1588 = vunpack.c.l.b16 %v1548
    %v1589 = vunpack.c.l.b16 %v1549
    %v1590 = vunpack.c.l.b16 %v1550
    %v1591 = vunpack.c.l.b16 %v1551
    %v1592 = vunpack.c.l.b16 %v1552
    %v1593 = vunpack.c.l.b16 %v1553
    %v1594 = vunpack.c.l.b16 %v1554
    %v1595 = vpack.c.b16 %v1580, %v1579
    %v1596 = vpack.c.b16 %v1582, %v1581
    %v1597 = vpack.c.b16 %v1584, %v1583
    %v1598 = vpack.c.b16 %v1586, %v1585
    %v1599 = vpack.c.b16 %v1588, %v1587
    %v1600 = vpack.c.b16 %v1590, %v1589
    %v1601 = vpack.c.b16 %v1592, %v1591
    %v1602 = vpack.c.b16 %v1594, %v1593
    %1611 = vmatprep.subr.bf16.mxu0 0
    %1612 = vmatpush1.bf16.msra.mxu0 %v1595
    %1613 = vmatprep.subr.bf16.mxu0 0
    %1614 = vmatpush1.bf16.msra.mxu0 %v1596
    %1615 = vmatprep.subr.bf16.mxu0 0
    %1616 = vmatpush1.bf16.msra.mxu0 %v1597
    %1617 = vmatprep.subr.bf16.mxu0 0
    %1618 = vmatpush1.bf16.msra.mxu0 %v1598
    %1619 = vmatprep.subr.bf16.mxu0 0
    %1620 = vmatpush1.bf16.msra.mxu0 %v1599
    %1621 = vmatprep.subr.bf16.mxu0 0
    %1622 = vmatpush1.bf16.msra.mxu0 %v1600
    %1623 = vmatprep.subr.bf16.mxu0 0
    %1624 = vmatpush1.bf16.msra.mxu0 %v1601
    %1625 = vmatprep.subr.bf16.mxu0 0
    %1626 = vmatpush1.bf16.msra.mxu0 %v1602
    %1627 = vmatprep.subr.bf16.mxu0 0
    %1628 = vmatpush1.bf16.msra.mxu0 0
    %1629 = vmatprep.subr.bf16.mxu0 0
    %1630 = vmatpush1.bf16.msra.mxu0 0
    %1631 = vmatprep.subr.bf16.mxu0 0
    %1632 = vmatpush1.bf16.msra.mxu0 0
    %1633 = vmatprep.subr.bf16.mxu0 0
    %1634 = vmatpush1.bf16.msra.mxu0 0
    %1635 = vmatprep.subr.bf16.mxu0 0
    %1636 = vmatpush1.bf16.msra.mxu0 0
    %1637 = vmatprep.subr.bf16.mxu0 0
    %1638 = vmatpush1.bf16.msra.mxu0 0
    %1639 = vmatprep.subr.bf16.mxu0 0
    %1640 = vmatpush1.bf16.msra.mxu0 0
    %1641 = vmatprep.subr.bf16.mxu0 0
    %1642 = vmatpush1.bf16.msra.mxu0 0
    %1643 = vmatprep.mubr.bf16.mxu0 0
    %1644 = vmatmul.mubr.bf16.gmra.mrb[0].mxu0 %v1522
    %v1645 = vpop.f32.mrb[0].mxu0
    %v1646 = vadd.f32 %v1561, %v1645
    %v1647 = vpop.f32.mrb[0].mxu0
    %v1648 = vpop.f32.mrb[0].mxu0
    %v1649 = vadd.f32 %v1561, %v1648
    %v1650 = vpop.f32.mrb[0].mxu0
    %1651 = vmatprep.mubr.bf16.mxu0 0
    %1652 = vmatmul.mubr.bf16.gmra.mrb[0].mxu0 %v1523
    %v1653 = vpop.f32.mrb[0].mxu0
    %v1654 = vadd.f32 %v1561, %v1653
    %v1655 = vpop.f32.mrb[0].mxu0
    %v1656 = vpop.f32.mrb[0].mxu0
    %v1657 = vadd.f32 %v1561, %v1656
    %v1658 = vpop.f32.mrb[0].mxu0
    %1659 = vmatprep.mubr.bf16.mxu0 0
    %1660 = vmatmul.mubr.bf16.gmra.mrb[0].mxu0 %v1524
    %v1661 = vpop.f32.mrb[0].mxu0
    %v1662 = vadd.f32 %v1561, %v1661
    %v1663 = vpop.f32.mrb[0].mxu0
    %v1664 = vpop.f32.mrb[0].mxu0
    %v1665 = vadd.f32 %v1561, %v1664
    %v1666 = vpop.f32.mrb[0].mxu0
    %1667 = vmatprep.mubr.bf16.mxu0 0
    %1668 = vmatmul.mubr.bf16.gmra.mrb[0].mxu0 %v1525
    %v1669 = vpop.f32.mrb[0].mxu0
    %v1670 = vadd.f32 %v1561, %v1669
    %v1671 = vpop.f32.mrb[0].mxu0
    %v1672 = vpop.f32.mrb[0].mxu0
    %v1673 = vadd.f32 %v1561, %v1672
    %v1674 = vpop.f32.mrb[0].mxu0
    %1675 = vmatprep.mubr.bf16.mxu0 0
    %1676 = vmatmul.mubr.bf16.gmra.mrb[0].mxu0 %v1526
    %v1677 = vpop.f32.mrb[0].mxu0
    %v1678 = vadd.f32 %v1561, %v1677
    %v1679 = vpop.f32.mrb[0].mxu0
    %v1680 = vpop.f32.mrb[0].mxu0
    %v1681 = vadd.f32 %v1561, %v1680
    %v1682 = vpop.f32.mrb[0].mxu0
    %1683 = vmatprep.mubr.bf16.mxu0 0
    %1684 = vmatmul.mubr.bf16.gmra.mrb[0].mxu0 %v1527
    %v1685 = vpop.f32.mrb[0].mxu0
    %v1686 = vadd.f32 %v1561, %v1685
    %v1687 = vpop.f32.mrb[0].mxu0
    %v1688 = vpop.f32.mrb[0].mxu0
    %v1689 = vadd.f32 %v1561, %v1688
    %v1690 = vpop.f32.mrb[0].mxu0
    %1691 = vmatprep.mubr.bf16.mxu0 0
    %1692 = vmatmul.mubr.bf16.gmra.mrb[0].mxu0 %v1528
    %v1693 = vpop.f32.mrb[0].mxu0
    %v1694 = vadd.f32 %v1561, %v1693
    %v1695 = vpop.f32.mrb[0].mxu0
    %v1696 = vpop.f32.mrb[0].mxu0
    %v1697 = vadd.f32 %v1561, %v1696
    %v1698 = vpop.f32.mrb[0].mxu0
    %1699 = vmatprep.mubr.bf16.mxu0 0
    %1700 = vmatmul.mubr.bf16.gmra.mrb[0].mxu0 %v1529
    %v1701 = vpop.f32.mrb[0].mxu0
    %v1702 = vadd.f32 %v1561, %v1701
    %v1703 = vpop.f32.mrb[0].mxu0
    %v1704 = vpop.f32.mrb[0].mxu0
    %v1705 = vadd.f32 %v1561, %v1704
    %v1706 = vpop.f32.mrb[0].mxu0
    %1707 = vmatprep.mubr.bf16.mxu0 0
    %1708 = vmatmul.mubr.bf16.gmra.mrb[0].mxu0 %v1530
    %v1709 = vpop.f32.mrb[0].mxu0
    %v1710 = vadd.f32 %v1561, %v1709
    %v1711 = vpop.f32.mrb[0].mxu0
    %v1712 = vpop.f32.mrb[0].mxu0
    %v1713 = vadd.f32 %v1561, %v1712
    %v1714 = vpop.f32.mrb[0].mxu0
    %1715 = vmatprep.mubr.bf16.mxu0 0
    %1716 = vmatmul.mubr.bf16.gmra.mrb[0].mxu0 %v1531
    %v1717 = vpop.f32.mrb[0].mxu0
    %v1718 = vadd.f32 %v1561, %v1717
    %v1719 = vpop.f32.mrb[0].mxu0
    %v1720 = vpop.f32.mrb[0].mxu0
    %v1721 = vadd.f32 %v1561, %v1720
    %v1722 = vpop.f32.mrb[0].mxu0
    %1723 = vmatprep.mubr.bf16.mxu0 0
    %1724 = vmatmul.mubr.bf16.gmra.mrb[0].mxu0 %v1532
    %v1725 = vpop.f32.mrb[0].mxu0
    %v1726 = vadd.f32 %v1561, %v1725
    %v1727 = vpop.f32.mrb[0].mxu0
    %v1728 = vpop.f32.mrb[0].mxu0
    %v1729 = vadd.f32 %v1561, %v1728
    %v1730 = vpop.f32.mrb[0].mxu0
    %1731 = vmatprep.mubr.bf16.mxu0 0
    %1732 = vmatmul.mubr.bf16.gmra.mrb[0].mxu0 %v1533
    %v1733 = vpop.f32.mrb[0].mxu0
    %v1734 = vadd.f32 %v1561, %v1733
    %v1735 = vpop.f32.mrb[0].mxu0
    %v1736 = vpop.f32.mrb[0].mxu0
    %v1737 = vadd.f32 %v1561, %v1736
    %v1738 = vpop.f32.mrb[0].mxu0
    %1739 = vmatprep.mubr.bf16.mxu0 0
    %1740 = vmatmul.mubr.bf16.gmra.mrb[0].mxu0 %v1534
    %v1741 = vpop.f32.mrb[0].mxu0
    %v1742 = vadd.f32 %v1561, %v1741
    %v1743 = vpop.f32.mrb[0].mxu0
    %v1744 = vpop.f32.mrb[0].mxu0
    %v1745 = vadd.f32 %v1561, %v1744
    %v1746 = vpop.f32.mrb[0].mxu0
    %1747 = vmatprep.mubr.bf16.mxu0 0
    %1748 = vmatmul.mubr.bf16.gmra.mrb[0].mxu0 %v1535
    %v1749 = vpop.f32.mrb[0].mxu0
    %v1750 = vadd.f32 %v1561, %v1749
    %v1751 = vpop.f32.mrb[0].mxu0
    %v1752 = vpop.f32.mrb[0].mxu0
    %v1753 = vadd.f32 %v1561, %v1752
    %v1754 = vpop.f32.mrb[0].mxu0
    %1755 = vmatprep.mubr.bf16.mxu0 0
    %1756 = vmatmul.mubr.bf16.gmra.mrb[0].mxu0 %v1536
    %v1757 = vpop.f32.mrb[0].mxu0
    %v1758 = vadd.f32 %v1561, %v1757
    %v1759 = vpop.f32.mrb[0].mxu0
    %v1760 = vpop.f32.mrb[0].mxu0
    %v1761 = vadd.f32 %v1561, %v1760
    %v1762 = vpop.f32.mrb[0].mxu0
    %1763 = vmatprep.mubr.bf16.mxu0 0
    %1764 = vmatmul.mubr.bf16.gmra.mrb[0].mxu0 %v1537
    %v1765 = vpop.f32.mrb[0].mxu0
    %v1766 = vadd.f32 %v1561, %v1765
    %v1767 = vpop.f32.mrb[0].mxu0
    %v1768 = vpop.f32.mrb[0].mxu0
    %v1769 = vadd.f32 %v1561, %v1768
    %v1770 = vpop.f32.mrb[0].mxu0
    %1771 = vdwg.mxu0
    %v1772 = vmax.f32 %v1646, 0.0
    %v1773 = vmax.f32 %v1649, 0.0
    %v1774 = vmax.f32 %v1654, 0.0
    %v1775 = vmax.f32 %v1657, 0.0
    %v1776 = vmax.f32 %v1662, 0.0
    %v1777 = vmax.f32 %v1665, 0.0
    %v1778 = vmax.f32 %v1670, 0.0
    %v1779 = vmax.f32 %v1673, 0.0
    %v1780 = vmax.f32 %v1678, 0.0
    %v1781 = vmax.f32 %v1681, 0.0
    %v1782 = vmax.f32 %v1686, 0.0
    %v1783 = vmax.f32 %v1689, 0.0
    %v1784 = vmax.f32 %v1694, 0.0
    %v1785 = vmax.f32 %v1697, 0.0
    %v1786 = vmax.f32 %v1702, 0.0
    %v1787 = vmax.f32 %v1705, 0.0
    %v1788 = vmax.f32 %v1710, 0.0
    %v1789 = vmax.f32 %v1713, 0.0
    %v1790 = vmax.f32 %v1718, 0.0
    %v1791 = vmax.f32 %v1721, 0.0
    %v1792 = vmax.f32 %v1726, 0.0
    %v1793 = vmax.f32 %v1729, 0.0
    %v1794 = vmax.f32 %v1734, 0.0
    %v1795 = vmax.f32 %v1737, 0.0
    %v1796 = vmax.f32 %v1742, 0.0
    %v1797 = vmax.f32 %v1745, 0.0
    %v1798 = vmax.f32 %v1750, 0.0
    %v1799 = vmax.f32 %v1753, 0.0
    %v1800 = vmax.f32 %v1758, 0.0
    %v1801 = vmax.f32 %v1761, 0.0
    %v1802 = vmax.f32 %v1766, 0.0
    %v1803 = vmax.f32 %v1769, 0.0
    %v1804 = vpack.c.bf16 %v1773, %v1772
    %v1805 = vpack.c.bf16 %v1775, %v1774
    %v1806 = vpack.c.bf16 %v1777, %v1776
    %v1807 = vpack.c.bf16 %v1779, %v1778
    %v1808 = vpack.c.bf16 %v1781, %v1780
    %v1809 = vpack.c.bf16 %v1783, %v1782
    %v1810 = vpack.c.bf16 %v1785, %v1784
    %v1811 = vpack.c.bf16 %v1787, %v1786
    %v1812 = vpack.c.bf16 %v1789, %v1788
    %v1813 = vpack.c.bf16 %v1791, %v1790
    %v1814 = vpack.c.bf16 %v1793, %v1792
    %v1815 = vpack.c.bf16 %v1795, %v1794
    %v1816 = vpack.c.bf16 %v1797, %v1796
    %v1817 = vpack.c.bf16 %v1799, %v1798
    %v1818 = vpack.c.bf16 %v1801, %v1800
    %v1819 = vpack.c.bf16 %v1803, %v1802
    %v1820 = vld [vmem:[%s2] sm:$0x3]
    %v1823 = vunpack.c.l.s4 1966171168
    %v1824 = vunpack.c.0.s8 %v1823
    %v1825 = vlaneseq
    %v1826 = vshrl.u32 %v1825, 7
    %v1827 = vsub.s32 %v1824, %v1826
    %v1828 = vrot.slane %v1820, %v1827
    %v1829 = vcombine.high %v1828, %v1828
    %v1831 = vunpack.c.l.s4 1966171168
    %v1832 = vunpack.c.0.s8 %v1831
    %v1833 = vlaneseq
    %v1834 = vshrl.u32 %v1833, 7
    %v1835 = vsub.s32 %v1832, %v1834
    %v1836 = vrot.slane %v1828, %v1835
    %v1838 = vunpack.c.l.s4 1966171168
    %v1839 = vunpack.c.0.s8 %v1838
    %v1840 = vlaneseq
    %v1841 = vshrl.u32 %v1840, 7
    %v1842 = vsub.s32 %v1839, %v1841
    %v1843 = vrot.slane %v1829, %v1842
    %1846 = vmatprep.subr.bf16.mxu0 0
    %1847 = vmatpush1.bf16.msra.mxu0 %v1804
    %1848 = vmatprep.subr.bf16.mxu0 0
    %1849 = vmatpush1.bf16.msra.mxu0 %v1805
    %1850 = vmatprep.subr.bf16.mxu0 0
    %1851 = vmatpush1.bf16.msra.mxu0 %v1806
    %1852 = vmatprep.subr.bf16.mxu0 0
    %1853 = vmatpush1.bf16.msra.mxu0 %v1807
    %1854 = vmatprep.subr.bf16.mxu0 0
    %1855 = vmatpush1.bf16.msra.mxu0 %v1808
    %1856 = vmatprep.subr.bf16.mxu0 0
    %1857 = vmatpush1.bf16.msra.mxu0 %v1809
    %1858 = vmatprep.subr.bf16.mxu0 0
    %1859 = vmatpush1.bf16.msra.mxu0 %v1810
    %1860 = vmatprep.subr.bf16.mxu0 0
    %1861 = vmatpush1.bf16.msra.mxu0 %v1811
    %1862 = vmatprep.subr.bf16.mxu0 0
    %1863 = vmatpush1.bf16.msra.mxu0 %v1812
    %1864 = vmatprep.subr.bf16.mxu0 0
    %1865 = vmatpush1.bf16.msra.mxu0 %v1813
    %1866 = vmatprep.subr.bf16.mxu0 0
    %1867 = vmatpush1.bf16.msra.mxu0 %v1814
    %1868 = vmatprep.subr.bf16.mxu0 0
    %1869 = vmatpush1.bf16.msra.mxu0 %v1815
    %1870 = vmatprep.subr.bf16.mxu0 0
    %1871 = vmatpush1.bf16.msra.mxu0 %v1816
    %1872 = vmatprep.subr.bf16.mxu0 0
    %1873 = vmatpush1.bf16.msra.mxu0 %v1817
    %1874 = vmatprep.subr.bf16.mxu0 0
    %1875 = vmatpush1.bf16.msra.mxu0 %v1818
    %1876 = vmatprep.subr.bf16.mxu0 0
    %1877 = vmatpush1.bf16.msra.mxu0 %v1819
    %1878 = vmatprep.mubr.bf16.mxu0 %v1843
    %1879 = vmatmul.mubr.bf16.gmra.mrb[0].mxu0 %v1836
    %v1880 = vpop.f32.mrb[0].mxu0
    %v1881 = vadd.f32 0.0, %v1880
    %v1882 = vpop.f32.mrb[0].mxu0
    %v1883 = vpop.f32.mrb[0].mxu0
    %v1884 = vpop.f32.mrb[0].mxu0
    %1885 = vdwg.mxu0
    %v1886 = vld [vmem:[#allocation8] sm:$0xf]
    %v1887 = vld [vmem:[#allocation8 + $0x4] sm:$0xf]
    %v1888 = vld [vmem:[#allocation8 + $0x8] sm:$0xf]
    %v1889 = vld [vmem:[#allocation8 + $0xc] sm:$0xf]
    %v1890 = vld [vmem:[#allocation8 + $0x10] sm:$0xf]
    %v1891 = vld [vmem:[#allocation8 + $0x14] sm:$0xf]
    %v1892 = vld [vmem:[#allocation8 + $0x18] sm:$0xf]
    %v1893 = vld [vmem:[#allocation8 + $0x1c] sm:$0xf]
    %v1894 = vld [vmem:[#allocation8 + $0x20] sm:$0xf]
    %v1895 = vld [vmem:[#allocation8 + $0x24] sm:$0xf]
    %v1896 = vld [vmem:[#allocation8 + $0x28] sm:$0xf]
    %v1897 = vld [vmem:[#allocation8 + $0x2c] sm:$0xf]
    %v1898 = vld [vmem:[#allocation8 + $0x30] sm:$0xf]
    %v1899 = vld [vmem:[#allocation8 + $0x34] sm:$0xf]
    %v1900 = vld [vmem:[#allocation8 + $0x38] sm:$0xf]
    %v1901 = vld [vmem:[#allocation8 + $0x3c] sm:$0xf]
    %v1902 = vld [vmem:[%s6] sm:$0x1]
    %v1903 = vld [vmem:[#allocation10] sm:$0xff]
    %v1904 = vld [vmem:[#allocation10 + $0x8] sm:$0xff]
    %v1905 = vld [vmem:[#allocation10 + $0x10] sm:$0xff]
    %v1906 = vld [vmem:[#allocation10 + $0x18] sm:$0xff]
    %v1907 = vld [vmem:[#allocation10 + $0x20] sm:$0xff]
    %v1908 = vld [vmem:[#allocation10 + $0x28] sm:$0xff]
    %v1909 = vld [vmem:[#allocation10 + $0x30] sm:$0xff]
    %v1910 = vld [vmem:[#allocation10 + $0x38] sm:$0xff]
    %v1911 = vld [vmem:[#allocation10 + $0x40] sm:$0xff]
    %v1912 = vld [vmem:[#allocation10 + $0x48] sm:$0xff]
    %v1913 = vld [vmem:[#allocation10 + $0x50] sm:$0xff]
    %v1914 = vld [vmem:[#allocation10 + $0x58] sm:$0xff]
    %v1915 = vld [vmem:[#allocation10 + $0x60] sm:$0xff]
    %v1916 = vld [vmem:[#allocation10 + $0x68] sm:$0xff]
    %v1917 = vld [vmem:[#allocation10 + $0x70] sm:$0xff]
    %v1918 = vld [vmem:[#allocation10 + $0x78] sm:$0xff]
    %v1919 = vld [vmem:[%s8] sm:$0x3]
    %v1920 = vld [vmem:[#allocation11] sm:$0xf]
    %v1921 = vld [vmem:[#allocation11 + $0x4] sm:$0xf]
    %v1922 = vld [vmem:[#allocation11 + $0x8] sm:$0xf]
    %v1923 = vld [vmem:[#allocation11 + $0xc] sm:$0xf]
    %v1924 = vld [vmem:[#allocation11 + $0x10] sm:$0xf]
    %v1925 = vld [vmem:[#allocation11 + $0x14] sm:$0xf]
    %v1926 = vld [vmem:[#allocation11 + $0x18] sm:$0xf]
    %v1927 = vld [vmem:[#allocation11 + $0x1c] sm:$0xf]
    %v1928 = vld [vmem:[#allocation11 + $0x20] sm:$0xf]
    %v1929 = vld [vmem:[#allocation11 + $0x24] sm:$0xf]
    %v1930 = vld [vmem:[#allocation11 + $0x28] sm:$0xf]
    %v1931 = vld [vmem:[#allocation11 + $0x2c] sm:$0xf]
    %v1932 = vld [vmem:[#allocation11 + $0x30] sm:$0xf]
    %v1933 = vld [vmem:[#allocation11 + $0x34] sm:$0xf]
    %v1934 = vld [vmem:[#allocation11 + $0x38] sm:$0xf]
    %v1935 = vld [vmem:[#allocation11 + $0x3c] sm:$0xf]
    %v1936 = vld [vmem:[#allocation11 + $0x40] sm:$0xf]
    %v1937 = vld [vmem:[#allocation11 + $0x44] sm:$0xf]
    %v1938 = vld [vmem:[#allocation11 + $0x48] sm:$0xf]
    %v1939 = vld [vmem:[#allocation11 + $0x4c] sm:$0xf]
    %v1940 = vld [vmem:[#allocation11 + $0x50] sm:$0xf]
    %v1941 = vld [vmem:[#allocation11 + $0x54] sm:$0xf]
    %v1942 = vld [vmem:[#allocation11 + $0x58] sm:$0xf]
    %v1943 = vld [vmem:[#allocation11 + $0x5c] sm:$0xf]
    %v1944 = vld [vmem:[#allocation11 + $0x60] sm:$0xf]
    %v1945 = vld [vmem:[#allocation11 + $0x64] sm:$0xf]
    %v1946 = vld [vmem:[#allocation11 + $0x68] sm:$0xf]
    %v1947 = vld [vmem:[#allocation11 + $0x6c] sm:$0xf]
    %v1948 = vld [vmem:[#allocation11 + $0x70] sm:$0xf]
    %v1949 = vld [vmem:[#allocation11 + $0x74] sm:$0xf]
    %v1950 = vld [vmem:[#allocation11 + $0x78] sm:$0xf]
    %v1951 = vld [vmem:[#allocation11 + $0x7c] sm:$0xf]
    %v1952 = vld [vmem:[%s10] sm:$0x1]
    %v1953 = vpack.c.bf16 %v1881, %v1881
    %v1955 = vlaneseq
    %v1956 = vshrl.u32 %v1955, 7
    %v1957 = vsub.s32 0, %v1956
    %v1958 = vrot.slane %v1902, %v1957
    %v1976 = vunpack.c.l.b16 %v1886
    %v1977 = vunpack.c.l.b16 %v1887
    %v1978 = vunpack.c.l.b16 %v1888
    %v1979 = vunpack.c.l.b16 %v1889
    %v1980 = vunpack.c.l.b16 %v1890
    %v1981 = vunpack.c.l.b16 %v1891
    %v1982 = vunpack.c.l.b16 %v1892
    %v1983 = vunpack.c.l.b16 %v1893
    %v1984 = vunpack.c.l.b16 %v1894
    %v1985 = vunpack.c.l.b16 %v1895
    %v1986 = vunpack.c.l.b16 %v1896
    %v1987 = vunpack.c.l.b16 %v1897
    %v1988 = vunpack.c.l.b16 %v1898
    %v1989 = vunpack.c.l.b16 %v1899
    %v1990 = vunpack.c.l.b16 %v1900
    %v1991 = vunpack.c.l.b16 %v1901
    %v1992 = vpack.c.b16 %v1977, %v1976
    %v1993 = vpack.c.b16 %v1979, %v1978
    %v1994 = vpack.c.b16 %v1981, %v1980
    %v1995 = vpack.c.b16 %v1983, %v1982
    %v1996 = vpack.c.b16 %v1985, %v1984
    %v1997 = vpack.c.b16 %v1987, %v1986
    %v1998 = vpack.c.b16 %v1989, %v1988
    %v1999 = vpack.c.b16 %v1991, %v1990
    %2008 = vmatprep.subr.bf16.mxu0 0
    %2009 = vmatpush1.bf16.msra.mxu0 %v1992
    %2010 = vmatprep.subr.bf16.mxu0 0
    %2011 = vmatpush1.bf16.msra.mxu0 %v1993
    %2012 = vmatprep.subr.bf16.mxu0 0
    %2013 = vmatpush1.bf16.msra.mxu0 %v1994
    %2014 = vmatprep.subr.bf16.mxu0 0
    %2015 = vmatpush1.bf16.msra.mxu0 %v1995
    %2016 = vmatprep.subr.bf16.mxu0 0
    %2017 = vmatpush1.bf16.msra.mxu0 %v1996
    %2018 = vmatprep.subr.bf16.mxu0 0
    %2019 = vmatpush1.bf16.msra.mxu0 %v1997
    %2020 = vmatprep.subr.bf16.mxu0 0
    %2021 = vmatpush1.bf16.msra.mxu0 %v1998
    %2022 = vmatprep.subr.bf16.mxu0 0
    %2023 = vmatpush1.bf16.msra.mxu0 %v1999
    %2024 = vmatprep.subr.bf16.mxu0 0
    %2025 = vmatpush1.bf16.msra.mxu0 0
    %2026 = vmatprep.subr.bf16.mxu0 0
    %2027 = vmatpush1.bf16.msra.mxu0 0
    %2028 = vmatprep.subr.bf16.mxu0 0
    %2029 = vmatpush1.bf16.msra.mxu0 0
    %2030 = vmatprep.subr.bf16.mxu0 0
    %2031 = vmatpush1.bf16.msra.mxu0 0
    %2032 = vmatprep.subr.bf16.mxu0 0
    %2033 = vmatpush1.bf16.msra.mxu0 0
    %2034 = vmatprep.subr.bf16.mxu0 0
    %2035 = vmatpush1.bf16.msra.mxu0 0
    %2036 = vmatprep.subr.bf16.mxu0 0
    %2037 = vmatpush1.bf16.msra.mxu0 0
    %2038 = vmatprep.subr.bf16.mxu0 0
    %2039 = vmatpush1.bf16.msra.mxu0 0
    %2040 = vmatprep.mubr.bf16.mxu0 0
    %2041 = vmatmul.mubr.bf16.gmra.mrb[0].mxu0 %v1953
    %v2042 = vpop.f32.mrb[0].mxu0
    %v2043 = vadd.f32 %v1958, %v2042
    %v2044 = vpop.f32.mrb[0].mxu0
    %v2045 = vpop.f32.mrb[0].mxu0
    %v2046 = vpop.f32.mrb[0].mxu0
    %2047 = vdwg.mxu0
    %v2048 = vmax.f32 %v2043, 0.0
    %v2049 = vpack.c.bf16 %v2048, %v2048
    %v2051 = vlaneseq
    %v2052 = vshrl.u32 %v2051, 7
    %v2053 = vsub.s32 0, %v2052
    %v2054 = vrot.slane %v1919, %v2053
    %v2055 = vlaneseq
    %v2056 = vshrl.u32 %v2055, 7
    %v2057 = vsub.s32 1, %v2056
    %v2058 = vrot.slane %v1919, %v2057
    %v2077 = vunpack.c.l.b16 %v1903
    %v2078 = vunpack.c.h.b16 %v1903
    %v2079 = vunpack.c.l.b16 %v1904
    %v2080 = vunpack.c.h.b16 %v1904
    %v2081 = vunpack.c.l.b16 %v1905
    %v2082 = vunpack.c.h.b16 %v1905
    %v2083 = vunpack.c.l.b16 %v1906
    %v2084 = vunpack.c.h.b16 %v1906
    %v2085 = vunpack.c.l.b16 %v1907
    %v2086 = vunpack.c.h.b16 %v1907
    %v2087 = vunpack.c.l.b16 %v1908
    %v2088 = vunpack.c.h.b16 %v1908
    %v2089 = vunpack.c.l.b16 %v1909
    %v2090 = vunpack.c.h.b16 %v1909
    %v2091 = vunpack.c.l.b16 %v1910
    %v2092 = vunpack.c.h.b16 %v1910
    %v2093 = vunpack.c.l.b16 %v1911
    %v2094 = vunpack.c.h.b16 %v1911
    %v2095 = vunpack.c.l.b16 %v1912
    %v2096 = vunpack.c.h.b16 %v1912
    %v2097 = vunpack.c.l.b16 %v1913
    %v2098 = vunpack.c.h.b16 %v1913
    %v2099 = vunpack.c.l.b16 %v1914
    %v2100 = vunpack.c.h.b16 %v1914
    %v2101 = vunpack.c.l.b16 %v1915
    %v2102 = vunpack.c.h.b16 %v1915
    %v2103 = vunpack.c.l.b16 %v1916
    %v2104 = vunpack.c.h.b16 %v1916
    %v2105 = vunpack.c.l.b16 %v1917
    %v2106 = vunpack.c.h.b16 %v1917
    %v2107 = vunpack.c.l.b16 %v1918
    %v2108 = vunpack.c.h.b16 %v1918
    %v2109 = vpack.c.b16 %v2079, %v2077
    %v2110 = vpack.c.b16 %v2080, %v2078
    %v2111 = vpack.c.b16 %v2083, %v2081
    %v2112 = vpack.c.b16 %v2084, %v2082
    %v2113 = vpack.c.b16 %v2087, %v2085
    %v2114 = vpack.c.b16 %v2088, %v2086
    %v2115 = vpack.c.b16 %v2091, %v2089
    %v2116 = vpack.c.b16 %v2092, %v2090
    %v2117 = vpack.c.b16 %v2095, %v2093
    %v2118 = vpack.c.b16 %v2096, %v2094
    %v2119 = vpack.c.b16 %v2099, %v2097
    %v2120 = vpack.c.b16 %v2100, %v2098
    %v2121 = vpack.c.b16 %v2103, %v2101
    %v2122 = vpack.c.b16 %v2104, %v2102
    %v2123 = vpack.c.b16 %v2107, %v2105
    %v2124 = vpack.c.b16 %v2108, %v2106
    %2141 = vmatprep.subr.bf16.mxu0 %v2110
    %2142 = vmatpush1.bf16.msra.mxu0 %v2109
    %2143 = vmatprep.subr.bf16.mxu0 %v2112
    %2144 = vmatpush1.bf16.msra.mxu0 %v2111
    %2145 = vmatprep.subr.bf16.mxu0 %v2114
    %2146 = vmatpush1.bf16.msra.mxu0 %v2113
    %2147 = vmatprep.subr.bf16.mxu0 %v2116
    %2148 = vmatpush1.bf16.msra.mxu0 %v2115
    %2149 = vmatprep.subr.bf16.mxu0 %v2118
    %2150 = vmatpush1.bf16.msra.mxu0 %v2117
    %2151 = vmatprep.subr.bf16.mxu0 %v2120
    %2152 = vmatpush1.bf16.msra.mxu0 %v2119
    %2153 = vmatprep.subr.bf16.mxu0 %v2122
    %2154 = vmatpush1.bf16.msra.mxu0 %v2121
    %2155 = vmatprep.subr.bf16.mxu0 %v2124
    %2156 = vmatpush1.bf16.msra.mxu0 %v2123
    %2157 = vmatprep.subr.bf16.mxu0 0
    %2158 = vmatpush1.bf16.msra.mxu0 0
    %2159 = vmatprep.subr.bf16.mxu0 0
    %2160 = vmatpush1.bf16.msra.mxu0 0
    %2161 = vmatprep.subr.bf16.mxu0 0
    %2162 = vmatpush1.bf16.msra.mxu0 0
    %2163 = vmatprep.subr.bf16.mxu0 0
    %2164 = vmatpush1.bf16.msra.mxu0 0
    %2165 = vmatprep.subr.bf16.mxu0 0
    %2166 = vmatpush1.bf16.msra.mxu0 0
    %2167 = vmatprep.subr.bf16.mxu0 0
    %2168 = vmatpush1.bf16.msra.mxu0 0
    %2169 = vmatprep.subr.bf16.mxu0 0
    %2170 = vmatpush1.bf16.msra.mxu0 0
    %2171 = vmatprep.subr.bf16.mxu0 0
    %2172 = vmatpush1.bf16.msra.mxu0 0
    %2173 = vmatprep.mubr.bf16.mxu0 0
    %2174 = vmatmul.mubr.bf16.gmra.mrb[0].mxu0 %v2049
    %v2175 = vpop.f32.mrb[0].mxu0
    %v2176 = vadd.f32 %v2054, %v2175
    %v2177 = vpop.f32.mrb[0].mxu0
    %v2178 = vadd.f32 %v2058, %v2177
    %v2179 = vpop.f32.mrb[0].mxu0
    %v2180 = vpop.f32.mrb[0].mxu0
    %2181 = vdwg.mxu0
    %v2182 = vpack.c.bf16 %v2176, %v2176
    %v2183 = vpack.c.bf16 %v2178, %v2178
    %v2185 = vlaneseq
    %v2186 = vshrl.u32 %v2185, 7
    %v2187 = vsub.s32 0, %v2186
    %v2188 = vrot.slane %v1952, %v2187
    %v2222 = vunpack.c.l.b16 %v1920
    %v2223 = vunpack.c.l.b16 %v1921
    %v2224 = vunpack.c.l.b16 %v1922
    %v2225 = vunpack.c.l.b16 %v1923
    %v2226 = vunpack.c.l.b16 %v1924
    %v2227 = vunpack.c.l.b16 %v1925
    %v2228 = vunpack.c.l.b16 %v1926
    %v2229 = vunpack.c.l.b16 %v1927
    %v2230 = vunpack.c.l.b16 %v1928
    %v2231 = vunpack.c.l.b16 %v1929
    %v2232 = vunpack.c.l.b16 %v1930
    %v2233 = vunpack.c.l.b16 %v1931
    %v2234 = vunpack.c.l.b16 %v1932
    %v2235 = vunpack.c.l.b16 %v1933
    %v2236 = vunpack.c.l.b16 %v1934
    %v2237 = vunpack.c.l.b16 %v1935
    %v2238 = vunpack.c.l.b16 %v1936
    %v2239 = vunpack.c.l.b16 %v1937
    %v2240 = vunpack.c.l.b16 %v1938
    %v2241 = vunpack.c.l.b16 %v1939
    %v2242 = vunpack.c.l.b16 %v1940
    %v2243 = vunpack.c.l.b16 %v1941
    %v2244 = vunpack.c.l.b16 %v1942
    %v2245 = vunpack.c.l.b16 %v1943
    %v2246 = vunpack.c.l.b16 %v1944
    %v2247 = vunpack.c.l.b16 %v1945
    %v2248 = vunpack.c.l.b16 %v1946
    %v2249 = vunpack.c.l.b16 %v1947
    %v2250 = vunpack.c.l.b16 %v1948
    %v2251 = vunpack.c.l.b16 %v1949
    %v2252 = vunpack.c.l.b16 %v1950
    %v2253 = vunpack.c.l.b16 %v1951
    %v2254 = vpack.c.b16 %v2223, %v2222
    %v2255 = vpack.c.b16 %v2225, %v2224
    %v2256 = vpack.c.b16 %v2227, %v2226
    %v2257 = vpack.c.b16 %v2229, %v2228
    %v2258 = vpack.c.b16 %v2231, %v2230
    %v2259 = vpack.c.b16 %v2233, %v2232
    %v2260 = vpack.c.b16 %v2235, %v2234
    %v2261 = vpack.c.b16 %v2237, %v2236
    %v2262 = vpack.c.b16 %v2239, %v2238
    %v2263 = vpack.c.b16 %v2241, %v2240
    %v2264 = vpack.c.b16 %v2243, %v2242
    %v2265 = vpack.c.b16 %v2245, %v2244
    %v2266 = vpack.c.b16 %v2247, %v2246
    %v2267 = vpack.c.b16 %v2249, %v2248
    %v2268 = vpack.c.b16 %v2251, %v2250
    %v2269 = vpack.c.b16 %v2253, %v2252
    %2286 = vmatprep.subr.bf16.mxu0 0
    %2287 = vmatpush1.bf16.msra.mxu0 %v2254
    %2288 = vmatprep.subr.bf16.mxu0 0
    %2289 = vmatpush1.bf16.msra.mxu0 %v2255
    %2290 = vmatprep.subr.bf16.mxu0 0
    %2291 = vmatpush1.bf16.msra.mxu0 %v2256
    %2292 = vmatprep.subr.bf16.mxu0 0
    %2293 = vmatpush1.bf16.msra.mxu0 %v2257
    %2294 = vmatprep.subr.bf16.mxu0 0
    %2295 = vmatpush1.bf16.msra.mxu0 %v2258
    %2296 = vmatprep.subr.bf16.mxu0 0
    %2297 = vmatpush1.bf16.msra.mxu0 %v2259
    %2298 = vmatprep.subr.bf16.mxu0 0
    %2299 = vmatpush1.bf16.msra.mxu0 %v2260
    %2300 = vmatprep.subr.bf16.mxu0 0
    %2301 = vmatpush1.bf16.msra.mxu0 %v2261
    %2302 = vmatprep.subr.bf16.mxu0 0
    %2303 = vmatpush1.bf16.msra.mxu0 %v2262
    %2304 = vmatprep.subr.bf16.mxu0 0
    %2305 = vmatpush1.bf16.msra.mxu0 %v2263
    %2306 = vmatprep.subr.bf16.mxu0 0
    %2307 = vmatpush1.bf16.msra.mxu0 %v2264
    %2308 = vmatprep.subr.bf16.mxu0 0
    %2309 = vmatpush1.bf16.msra.mxu0 %v2265
    %2310 = vmatprep.subr.bf16.mxu0 0
    %2311 = vmatpush1.bf16.msra.mxu0 %v2266
    %2312 = vmatprep.subr.bf16.mxu0 0
    %2313 = vmatpush1.bf16.msra.mxu0 %v2267
    %2314 = vmatprep.subr.bf16.mxu0 0
    %2315 = vmatpush1.bf16.msra.mxu0 %v2268
    %2316 = vmatprep.subr.bf16.mxu0 0
    %2317 = vmatpush1.bf16.msra.mxu0 %v2269
    %2318 = vmatprep.mubr.bf16.mxu0 %v2183
    %2319 = vmatmul.mubr.bf16.gmra.mrb[0].mxu0 %v2182
    %v2320 = vpop.f32.mrb[0].mxu0
    %v2321 = vadd.f32 %v2188, %v2320
    %v2322 = vpop.f32.mrb[0].mxu0
    %v2323 = vpop.f32.mrb[0].mxu0
    %v2324 = vpop.f32.mrb[0].mxu0
    %2325 = vdwg.mxu0
    %vm2326 = vcmask 1041408
    %v2327 = vsel %vm2326, %v2321, -inf
    %2328 = vmax.xlane.f32.xlu0 %v2327
    %v2329 = vpop.xlane.xlu0 %2328
    %v2330 = vsub.f32 %v2321, %v2329
    %v2331 = vmul.f32 %v2330, 1.442695
    %v2332 = vpow.pop %v2331
    %v2333 = vsel %vm2326, %v2332, 0.0
    %2334 = vadd.xlane.f32.xlu0 %v2333
    %v2335 = vpop.xlane.xlu0 %2334
    %v2336 = vlog2.pop %v2335
    %v2337 = vmul.f32 %v2336, 0.6931472
    %v2338 = vsub.f32 %v2330, %v2337
    %2339 = vst [vmem:[#allocation13] sm:$0x3] %v2338
    %v2342 = vcombine.low %v2176, %v2178
    %v2344 = vunpack.c.l.s4 1983009808
    %v2345 = vunpack.c.0.s8 %v2344
    %v2346 = vlaneseq
    %v2347 = vshrl.u32 %v2346, 7
    %v2348 = vsub.s32 %v2345, %v2347
    %v2349 = vrot.slane %v2342, %v2348
    %2351 = vst [vmem:[#allocation14] sm:$0xf] %v2349
    // Predicated region
    $region70: #{gcn_forward.1} parent=1 // pred_check
      _
    $region71: #{gcn_forward.1} parent=1 // pred_check_branch
      %2353 = sbr.rel (0) target = $region73
    $region72: #{gcn_forward.1} parent=1 // pred_region
      %s2355 = ssub.s32 32, 32
      %2356 = vsyncadd [#allocation4], %s2355
      %s2358 = sshll.u32 [#allocation13], 4
      %s2359 = int_to_ptr.vmem [resolvable:$true] %s2358
      %2361 = dma.vmem_to_hbm [thread:$0]  %s2359, 32, %s11, [#allocation4]
    $region73: #{gcn_forward.1} parent=1 // pred_fallthru
      _
    // Predicated region
    $region74: #{gcn_forward.1} parent=1 // pred_check
      _
    $region75: #{gcn_forward.1} parent=1 // pred_check_branch
      %2363 = sbr.rel (0) target = $region77
    $region76: #{gcn_forward.1} parent=1 // pred_region
      %s2365 = ssub.s32 64, 64
      %2366 = vsyncadd [#allocation15], %s2365
      %s2368 = sshll.u32 [#allocation14], 4
      %s2369 = int_to_ptr.vmem [resolvable:$true] %s2368
      %2371 = dma.vmem_to_hbm [thread:$0]  %s2369, 64, %s12, [#allocation15]
    $region77: #{gcn_forward.1} parent=1 // pred_fallthru
      _
    // Predicated region
    $region78: #{gcn_forward.1} parent=1 // pred_check
      _
    $region79: #{gcn_forward.1} parent=1 // pred_check_branch
      %2373 = sbr.rel (0) target = $region81
    $region80: #{gcn_forward.1} parent=1 // pred_region
      %2374 = dma.done [#allocation4], 32
    $region81: #{gcn_forward.1} parent=1 // pred_fallthru
      _
    // Predicated region
    $region82: #{gcn_forward.1} parent=1 // pred_check
      _
    $region83: #{gcn_forward.1} parent=1 // pred_check_branch
      %2376 = sbr.rel (0) target = $region85
    $region84: #{gcn_forward.1} parent=1 // pred_region
      %2377 = dma.done [#allocation15], 64
    $region85: #{gcn_forward.1} parent=1 // pred_fallthru
      _
    %2378 = vsyncpa [#allocation3], 1
    %2379 = vsyncpa [#allocation6], 1
    %2380 = vsyncpa [#allocation9], 1
    %2381 = vsyncpa [#allocation12], 1
    %2382 = vsyncpa [#allocation4], 1
    %2383 = vsyncpa [#allocation15], 1

</llo_original>
